<compile_context>
chip_gen: v7x
topology: tpu7x:2x2x1
jax: 0.10.0
libtpu: 0.0.40
codegen_flags: <defaults>
</compile_context>

<pallas_src>
import functools

import jax
import jax.numpy as jnp
from jax import lax
from jax.experimental import pallas as pl
from jax.experimental.pallas import tpu as pltpu


def _gru_kernel(S_chunk, Bb, H, H_pad, unroll,
                maxlen_ref,                                   # (n_bblk,) SMEM scalar prefetch
                x_ref, lens_ref, wih_ref, whh_ref, bih_ref, bhh_ref,
                o_ref,
                gx_sc, ot_sc, h_sc):
    """One grid step == one (batch block, time chunk).

    x_ref    : (Bb, S_chunk, E)      batch-major input chunk
    lens_ref : (Bb, 1)               int32 sequence lengths
    wih_ref  : (E, 3*H_pad)          fused input weights  [r | z | n]
    whh_ref  : (H_pad, 3*H_pad)      fused hidden weights [r | z | n]
    bih_ref  : (1, 3*H_pad)          fused input bias
    bhh_ref  : (1, 3*H_pad)          fused hidden bias
    o_ref    : (Bb, S_chunk, H)      outputs (zeros at padded timesteps)
    gx_sc    : (S_chunk, Bb, 3*H_pad) scratch: time-major input gate projections
    ot_sc    : (S_chunk, Bb, H_pad)   scratch: time-major output staging
    h_sc     : (Bb, H_pad)            scratch: hidden-state carry across chunks
    """
    bblk = pl.program_id(0)
    schunk = pl.program_id(1)
    t0 = schunk * S_chunk

    # New batch block -> reset hidden-state carry.
    @pl.when(schunk == 0)
    def _():
        h_sc[...] = jnp.zeros_like(h_sc)

    blk_max = maxlen_ref[bblk]            # scalar from SMEM
    active = blk_max > t0

    @pl.when(jnp.logical_not(active))
    def _():
        # Every sequence of this block has already ended: packed-sequence padding
        # semantics -> zeros; h is no longer needed for later chunks either.
        o_ref[...] = jnp.zeros_like(o_ref)

    @pl.when(active)
    def _():
        E = x_ref.shape[-1]
        # One-time reorder to time-major inside VMEM (lane dim untouched), so each
        # recurrence step reads a contiguous (Bb, 3*H_pad) slab.
        x_tm = pltpu.einshape("bte->tbe", x_ref[...])               # (S_chunk, Bb, E)
        x2 = x_tm.reshape(S_chunk * Bb, E)
        # Fused input projection for all three gates: one wide MXU matmul per chunk.
        gx = jnp.dot(x2, wih_ref[...], preferred_element_type=jnp.float32)
        gx_sc[...] = (gx + bih_ref[...]).reshape(S_chunk, Bb, 3 * H_pad)

        # Hoist loop-invariant loads off the serial recurrence.
        whh = whh_ref[...]                                          # (H_pad, 3*H_pad)
        bhh = bhh_ref[...]                                          # (1, 3*H_pad)
        lens = lens_ref[...]                                        # (Bb, 1) int32

        def gru_step(t, h):                                         # h: (Bb, H_pad) f32
            gi = gx_sc[t]                                           # (Bb, 3*H_pad)
            # Single fused hidden matmul on the serial critical path.
            gh = jnp.dot(h, whh, preferred_element_type=jnp.float32) + bhh
            r = jax.nn.sigmoid(gi[:, :H_pad] + gh[:, :H_pad])
            z = jax.nn.sigmoid(gi[:, H_pad:2 * H_pad] + gh[:, H_pad:2 * H_pad])
            n = jnp.tanh(gi[:, 2 * H_pad:] + r * gh[:, 2 * H_pad:])
            h_new = (1.0 - z) * n + z * h
            valid = lens > (t0 + t)                                 # (Bb, 1) bool
            # pack/pad semantics: padded timesteps emit zeros, h frozen.
            ot_sc[t] = jnp.where(valid, h_new, 0.0)
            return jnp.where(valid, h_new, h)

        h_fin = lax.fori_loop(0, S_chunk, gru_step, h_sc[...], unroll=unroll)
        h_sc[...] = h_fin

        # One-time reorder back to batch-major and strip the H padding.
        out_bm = pltpu.einshape("tbh->bth", ot_sc[...])             # (Bb, S_chunk, H_pad)
        o_ref[...] = out_bm if H == H_pad else out_bm[:, :, :H]


def _pick_bb(B, block_b):
    """Batch block size: multiple of 8, and >=2 blocks whenever B allows (v7x 2 TCs)."""
    block_b = max(8, (block_b // 8) * 8)
    b8 = ((B + 7) // 8) * 8
    if b8 <= 8:
        return 8
    if b8 <= block_b:
        return max(8, ((b8 // 2 + 7) // 8) * 8)   # split into >=2 parallel blocks
    return block_b


@functools.partial(jax.jit, static_argnames=("block_b", "chunk_s"))
def gru_encoder_pallas(sents, lengths, params, block_b=128, chunk_s=128):
    """sents: (B, S, E) f32, lengths: (B,) i32 -> (B, S, H) f32 GRU outputs."""
    B, S, E = sents.shape
    wih, whh, bih, bhh = params["wih"], params["whh"], params["bih"], params["bhh"]
    H = whh.shape[-1]
    H_pad = ((H + 127) // 128) * 128              # lane-aligned gate blocks

    # ---- batch blocking -----------------------------------------------------
    Bb = _pick_bb(B, block_b)
    B_pad = ((B + Bb - 1) // Bb) * Bb
    n_bblk = B_pad // Bb

    # ---- time chunking ------------------------------------------------------
    if S <= chunk_s:
        S_chunk = S                               # block dim == full dim is always legal
    else:
        S_chunk = max(8, (chunk_s // 8) * 8)      # sublane-aligned chunk
    n_chunk = pl.cdiv(S, S_chunk)
    unroll = max(1, min(8, S_chunk))

    # ---- inputs: batch-major, batch padded (padded rows get length 0) -------
    x = sents if B_pad == B else jnp.pad(sents, ((0, B_pad - B), (0, 0), (0, 0)))
    lens = lengths.astype(jnp.int32).reshape(-1)
    lens_p = lens if B_pad == B else jnp.pad(lens, (0, B_pad - B))
    lens2 = lens_p.reshape(B_pad, 1)
    maxlen = jnp.max(lens_p.reshape(n_bblk, Bb), axis=1).astype(jnp.int32)  # (n_bblk,)

    # ---- pack gates along the lane axis (r | z | n), pad H to H_pad ---------
    def pack_w(w):                                # (3, X, H) -> (X, 3*H_pad)
        X = w.shape[1]
        wp = jnp.zeros((3, X, H_pad), w.dtype).at[:, :, :H].set(w)
        return jnp.transpose(wp, (1, 0, 2)).reshape(X, 3 * H_pad)

    wih_p = pack_w(wih)                                           # (E, 3*H_pad)
    whh_p = jnp.zeros((H_pad, 3 * H_pad), whh.dtype).at[:H, :].set(pack_w(whh))
    bih_p = pack_w(bih)                                           # (1, 3*H_pad)
    bhh_p = pack_w(bhh)                                           # (1, 3*H_pad)

    # ---- VMEM budget: blocks x2 buffers + weights x2 + scratch + headroom ---
    f32 = 4
    blk_in = Bb * S_chunk * E * f32
    blk_out = Bb * S_chunk * H * f32
    blk_lens = Bb * 128 * f32
    w_bytes = (E * 3 * H_pad + H_pad * 3 * H_pad + 2 * 8 * 3 * H_pad) * f32
    scratch = (S_chunk * Bb * 3 * H_pad + S_chunk * Bb * H_pad + Bb * H_pad) * f32
    footprint = 2 * (blk_in + blk_out + blk_lens + w_bytes) + scratch
    vmem_limit = int(min(max(int(footprint * 1.4) + (4 << 20), 32 << 20), 100 << 20))

    kernel = functools.partial(_gru_kernel, S_chunk, Bb, H, H_pad, unroll)

    grid_spec = pltpu.PrefetchScalarGridSpec(
        num_scalar_prefetch=1,
        grid=(n_bblk, n_chunk),
        in_specs=[
            pl.BlockSpec((Bb, S_chunk, E),   lambda i, s, ml: (i, s, 0)),  # x (batch-major)
            pl.BlockSpec((Bb, 1),            lambda i, s, ml: (i, 0)),     # lengths
            pl.BlockSpec((E, 3 * H_pad),     lambda i, s, ml: (0, 0)),     # W_ih fused
            pl.BlockSpec((H_pad, 3 * H_pad), lambda i, s, ml: (0, 0)),     # W_hh fused
            pl.BlockSpec((1, 3 * H_pad),     lambda i, s, ml: (0, 0)),     # b_ih fused
            pl.BlockSpec((1, 3 * H_pad),     lambda i, s, ml: (0, 0)),     # b_hh fused
        ],
        out_specs=pl.BlockSpec((Bb, S_chunk, H), lambda i, s, ml: (i, s, 0)),
        scratch_shapes=[
            pltpu.VMEM((S_chunk, Bb, 3 * H_pad), jnp.float32),   # input gate projections
            pltpu.VMEM((S_chunk, Bb, H_pad), jnp.float32),       # time-major out staging
            pltpu.VMEM((Bb, H_pad), jnp.float32),                # hidden-state carry
        ],
    )

    out = pl.pallas_call(
        kernel,
        out_shape=jax.ShapeDtypeStruct((B_pad, S, H), jnp.float32),
        grid_spec=grid_spec,
        compiler_params=pltpu.CompilerParams(
            dimension_semantics=("parallel", "arbitrary"),
            vmem_limit_bytes=vmem_limit),
    )(maxlen, x, lens2, wih_p, whh_p, bih_p, bhh_p)

    return out if B_pad == B else out[:B]                        # (B, S, H)


def gru_encoder_reference(sents, lengths, params):
    """Pure-JAX reference mirroring PyTorch nn.GRU + pack/pad semantics."""
    wih, whh, bih, bhh = params["wih"], params["whh"], params["bih"], params["bhh"]
    B, S, E = sents.shape
    H = whh.shape[-1]
    h = jnp.zeros((B, H), jnp.float32)
    outs = []
    for t in range(S):
        xt = sents[:, t]                                    # (B, E)
        gi_r = xt @ wih[0] + bih[0]
        gi_z = xt @ wih[1] + bih[1]
        gi_n = xt @ wih[2] + bih[2]
        gh_r = h @ whh[0] + bhh[0]
        gh_z = h @ whh[1] + bhh[1]
        gh_n = h @ whh[2] + bhh[2]
        r = jax.nn.sigmoid(gi_r + gh_r)
        z = jax.nn.sigmoid(gi_z + gh_z)
        n = jnp.tanh(gi_n + r * gh_n)
        h_new = (1.0 - z) * n + z * h
        valid = (t < lengths)[:, None]
        h = jnp.where(valid, h_new, h)
        outs.append(jnp.where(valid, h_new, 0.0))           # padded -> zeros
    return jnp.stack(outs, axis=1)                          # (B, S, H)


if __name__ == "__main__":
    # Small shapes consistent with the module: batch=2, seq=8, d_emb=32, d_out=32.
    B, S, E, H = 2, 8, 32, 32

    key = jax.random.PRNGKey(0)
    k_in, k1, k2, k3, k4 = jax.random.split(key, 5)
    sents = jax.random.normal(k_in, (B, S, E), dtype=jnp.float32)
    lengths = jnp.array([S, S - 3], dtype=jnp.int32)

    params = {
        "wih": 0.1 * jax.random.normal(k1, (3, E, H), dtype=jnp.float32),
        "whh": 0.1 * jax.random.normal(k2, (3, H, H), dtype=jnp.float32),
        "bih": 0.1 * jax.random.normal(k3, (3, 1, H), dtype=jnp.float32),
        "bhh": 0.1 * jax.random.normal(k4, (3, 1, H), dtype=jnp.float32),
    }

    out = jax.block_until_ready(gru_encoder_pallas(sents, lengths, params))
    assert out.shape == (B, S, H), out.shape

    ref = jax.block_until_ready(gru_encoder_reference(sents, lengths, params))
    assert jnp.allclose(out, ref, rtol=1e-4, atol=1e-4), \
        float(jnp.max(jnp.abs(out - ref)))

    print("KERNEL_OK")
</pallas_src>

<mosaic_0001>
module attributes {stable_mosaic.version = 11 : i64} {
  func.func @_gru_kernel(%arg0: i32, %arg1: i32, %arg2: memref<1xi32, #tpu.memory_space<smem>>, %arg3: memref<8x8x32xf32, #tpu.memory_space<vmem>>, %arg4: memref<8x1xi32, #tpu.memory_space<vmem>>, %arg5: memref<32x384xf32, #tpu.memory_space<vmem>>, %arg6: memref<128x384xf32, #tpu.memory_space<vmem>>, %arg7: memref<1x384xf32, #tpu.memory_space<vmem>>, %arg8: memref<1x384xf32, #tpu.memory_space<vmem>>, %arg9: memref<8x8x32xf32, #tpu.memory_space<vmem>>, %arg10: memref<8x8x384xf32, #tpu.memory_space<vmem>>, %arg11: memref<8x8x128xf32, #tpu.memory_space<vmem>>, %arg12: memref<8x128xf32, #tpu.memory_space<vmem>>) attributes {dimension_semantics = [#tpu.dimension_semantics<parallel>, #tpu.dimension_semantics<arbitrary>], iteration_bounds = array<i64: 1, 1>, scalar_prefetch = 1 : i64, scratch_operands = 3 : i64, tpu.core_type = #tpu.core_type<tc>, window_params = [{transform_indices = @transform_0, window_bounds = array<i64: 8, 8, 32>}, {transform_indices = @transform_1, window_bounds = array<i64: 8, 1>}, {pipeline_mode = #tpu.pipeline_mode<synchronous>, transform_indices = @transform_2, window_bounds = array<i64: 32, 384>}, {pipeline_mode = #tpu.pipeline_mode<synchronous>, transform_indices = @transform_3, window_bounds = array<i64: 128, 384>}, {pipeline_mode = #tpu.pipeline_mode<synchronous>, transform_indices = @transform_4, window_bounds = array<i64: 1, 384>}, {pipeline_mode = #tpu.pipeline_mode<synchronous>, transform_indices = @transform_5, window_bounds = array<i64: 1, 384>}, {transform_indices = @transform_6, window_bounds = array<i64: 8, 8, 32>}]} {
    %c8_i32 = arith.constant 8 : i32
    %0 = arith.muli %arg1, %c8_i32 : i32
    %c0_i32 = arith.constant 0 : i32
    %1 = arith.cmpi eq, %arg1, %c0_i32 : i32
    %2 = arith.extui %1 : i1 to i32
    %c0_i32_0 = arith.constant 0 : i32
    %3 = arith.cmpi ne, %2, %c0_i32_0 : i32
    scf.if %3 {
      %cst = arith.constant 0.000000e+00 : f32
      %12 = vector.broadcast %cst : f32 to vector<8x128xf32>
      %c0 = arith.constant 0 : index
      %c0_3 = arith.constant 0 : index
      %13 = vector.load %arg12[%c0, %c0_3] : memref<8x128xf32, #tpu.memory_space<vmem>>, vector<8x128xf32>
      tpu.vector_store %arg12[%c0, %c0_3], %12 {strides = array<i32>} : memref<8x128xf32, #tpu.memory_space<vmem>>, vector<8x128xf32>,
    } else {
    }
    %4 = arith.index_cast %arg0 : i32 to index
    %5 = memref.load %arg2[%4] : memref<1xi32, #tpu.memory_space<smem>>
    %6 = arith.cmpi sgt, %5, %0 : i32
    %true = arith.constant true
    %7 = arith.xori %6, %true : i1
    %8 = arith.extui %7 : i1 to i32
    %c0_i32_1 = arith.constant 0 : i32
    %9 = arith.cmpi ne, %8, %c0_i32_1 : i32
    scf.if %9 {
      %cst = arith.constant 0.000000e+00 : f32
      %12 = vector.broadcast %cst : f32 to vector<8x8x32xf32>
      %c0 = arith.constant 0 : index
      %c0_3 = arith.constant 0 : index
      %c0_4 = arith.constant 0 : index
      %13 = vector.load %arg9[%c0, %c0_3, %c0_4] : memref<8x8x32xf32, #tpu.memory_space<vmem>>, vector<8x8x32xf32>
      tpu.vector_store %arg9[%c0, %c0_3, %c0_4], %12 {strides = array<i32>} : memref<8x8x32xf32, #tpu.memory_space<vmem>>, vector<8x8x32xf32>,
    } else {
    }
    %10 = arith.extui %6 : i1 to i32
    %c0_i32_2 = arith.constant 0 : i32
    %11 = arith.cmpi ne, %10, %c0_i32_2 : i32
    scf.if %11 {
      %c0 = arith.constant 0 : index
      %c0_3 = arith.constant 0 : index
      %c0_4 = arith.constant 0 : index
      %12 = vector.load %arg3[%c0, %c0_3, %c0_4] : memref<8x8x32xf32, #tpu.memory_space<vmem>>, vector<8x8x32xf32>
      %13 = tpu.transpose %12, [1, 0, 2] : vector<8x8x32xf32> -> vector<8x8x32xf32>
      %14 = vector.shape_cast %13 : vector<8x8x32xf32> to vector<64x32xf32>
      %c0_5 = arith.constant 0 : index
      %c0_6 = arith.constant 0 : index
      %15 = vector.load %arg5[%c0_5, %c0_6] : memref<32x384xf32, #tpu.memory_space<vmem>>, vector<32x384xf32>
      %cst = arith.constant dense<0.000000e+00> : vector<64x384xf32>
      %16 = tpu.matmul %14, %15, %cst {dimension_numbers = #tpu.dot_dimension_numbers<[1], [0], [0], [1], [0, 0, 1, 1], [], []>} : vector<64x32xf32>, vector<32x384xf32>, vector<64x384xf32> -> vector<64x384xf32>
      %c0_7 = arith.constant 0 : index
      %c0_8 = arith.constant 0 : index
      %17 = vector.load %arg7[%c0_7, %c0_8] : memref<1x384xf32, #tpu.memory_space<vmem>>, vector<1x384xf32>
      %18 = vector.broadcast %17 : vector<1x384xf32> to vector<64x384xf32>
      %19 = arith.addf %16, %18 : vector<64x384xf32>
      %20 = vector.shape_cast %19 : vector<64x384xf32> to vector<8x8x384xf32>
      %c0_9 = arith.constant 0 : index
      %c0_10 = arith.constant 0 : index
      %c0_11 = arith.constant 0 : index
      %21 = vector.load %arg10[%c0_9, %c0_10, %c0_11] : memref<8x8x384xf32, #tpu.memory_space<vmem>>, vector<8x8x384xf32>
      tpu.vector_store %arg10[%c0_9, %c0_10, %c0_11], %20 {strides = array<i32>} : memref<8x8x384xf32, #tpu.memory_space<vmem>>, vector<8x8x384xf32>,
      %c0_12 = arith.constant 0 : index
      %c0_13 = arith.constant 0 : index
      %22 = vector.load %arg6[%c0_12, %c0_13] : memref<128x384xf32, #tpu.memory_space<vmem>>, vector<128x384xf32>
      %c0_14 = arith.constant 0 : index
      %c0_15 = arith.constant 0 : index
      %23 = vector.load %arg8[%c0_14, %c0_15] : memref<1x384xf32, #tpu.memory_space<vmem>>, vector<1x384xf32>
      %c0_16 = arith.constant 0 : index
      %c0_17 = arith.constant 0 : index
      %24 = vector.load %arg4[%c0_16, %c0_17] : memref<8x1xi32, #tpu.memory_space<vmem>>, vector<8x1xi32>
      %c0_18 = arith.constant 0 : index
      %c0_19 = arith.constant 0 : index
      %25 = vector.load %arg12[%c0_18, %c0_19] : memref<8x128xf32, #tpu.memory_space<vmem>>, vector<8x128xf32>
      %c0_i32_20 = arith.constant 0 : i32
      %26 = arith.index_cast %c0_i32_20 : i32 to index
      %c0_21 = arith.constant 0 : index
      %c0_22 = arith.constant 0 : index
      %27 = vector.load %arg10[%26, %c0_21, %c0_22] : memref<8x8x384xf32, #tpu.memory_space<vmem>>, vector<1x8x384xf32>
      %28 = vector.shape_cast %27 : vector<1x8x384xf32> to vector<8x384xf32>
      %cst_23 = arith.constant dense<0.000000e+00> : vector<8x384xf32>
      %29 = tpu.matmul %25, %22, %cst_23 {dimension_numbers = #tpu.dot_dimension_numbers<[1], [0], [0], [1], [0, 0, 1, 1], [], []>} : vector<8x128xf32>, vector<128x384xf32>, vector<8x384xf32> -> vector<8x384xf32>
      %30 = vector.broadcast %23 : vector<1x384xf32> to vector<8x384xf32>
      %31 = arith.addf %29, %30 : vector<8x384xf32>
      %32 = vector.extract_strided_slice %28 {offsets = [0, 0], sizes = [8, 128], strides = [1, 1]} : vector<8x384xf32> to vector<8x128xf32>
      %33 = vector.extract_strided_slice %31 {offsets = [0, 0], sizes = [8, 128], strides = [1, 1]} : vector<8x384xf32> to vector<8x128xf32>
      %34 = arith.addf %32, %33 : vector<8x128xf32>
      %35 = arith.negf %34 : vector<8x128xf32>
      %36 = math.exp %35 : vector<8x128xf32>
      %cst_24 = arith.constant 1.000000e+00 : f32
      %37 = vector.broadcast %cst_24 : f32 to vector<8x128xf32>
      %38 = arith.addf %37, %36 : vector<8x128xf32>
      %39 = arith.divf %37, %38 : vector<8x128xf32>
      %40 = vector.extract_strided_slice %28 {offsets = [0, 128], sizes = [8, 128], strides = [1, 1]} : vector<8x384xf32> to vector<8x128xf32>
      %41 = vector.extract_strided_slice %31 {offsets = [0, 128], sizes = [8, 128], strides = [1, 1]} : vector<8x384xf32> to vector<8x128xf32>
      %42 = arith.addf %40, %41 : vector<8x128xf32>
      %43 = arith.negf %42 : vector<8x128xf32>
      %44 = math.exp %43 : vector<8x128xf32>
      %cst_25 = arith.constant 1.000000e+00 : f32
      %45 = vector.broadcast %cst_25 : f32 to vector<8x128xf32>
      %46 = arith.addf %45, %44 : vector<8x128xf32>
      %47 = arith.divf %45, %46 : vector<8x128xf32>
      %48 = vector.extract_strided_slice %28 {offsets = [0, 256], sizes = [8, 128], strides = [1, 1]} : vector<8x384xf32> to vector<8x128xf32>
      %49 = vector.extract_strided_slice %31 {offsets = [0, 256], sizes = [8, 128], strides = [1, 1]} : vector<8x384xf32> to vector<8x128xf32>
      %50 = arith.mulf %39, %49 : vector<8x128xf32>
      %51 = arith.addf %48, %50 : vector<8x128xf32>
      %52 = math.tanh %51 : vector<8x128xf32>
      %cst_26 = arith.constant 1.000000e+00 : f32
      %53 = vector.broadcast %cst_26 : f32 to vector<8x128xf32>
      %54 = arith.subf %53, %47 : vector<8x128xf32>
      %55 = arith.mulf %54, %52 : vector<8x128xf32>
      %56 = arith.mulf %47, %25 : vector<8x128xf32>
      %57 = arith.addf %55, %56 : vector<8x128xf32>
      %58 = arith.addi %0, %c0_i32_20 : i32
      %59 = vector.broadcast %58 : i32 to vector<8x1xi32>
      %60 = arith.cmpi sgt, %24, %59 : vector<8x1xi32>
      %cst_27 = arith.constant 0.000000e+00 : f32
      %61 = vector.shape_cast %60 : vector<8x1xi1> to vector<8x1xi1>
      %62 = vector.broadcast %61 : vector<8x1xi1> to vector<8x128xi1>
      %63 = vector.broadcast %cst_27 : f32 to vector<8x128xf32>
      %64 = arith.select %62, %57, %63 : vector<8x128xi1>, vector<8x128xf32>
      %65 = arith.index_cast %c0_i32_20 : i32 to index
      %c0_28 = arith.constant 0 : index
      %c0_29 = arith.constant 0 : index
      %66 = vector.load %arg11[%65, %c0_28, %c0_29] : memref<8x8x128xf32, #tpu.memory_space<vmem>>, vector<1x8x128xf32>
      %67 = vector.shape_cast %66 : vector<1x8x128xf32> to vector<8x128xf32>
      %68 = vector.shape_cast %64 : vector<8x128xf32> to vector<1x8x128xf32>
      tpu.vector_store %arg11[%65, %c0_28, %c0_29], %68 {strides = array<i32>} : memref<8x8x128xf32, #tpu.memory_space<vmem>>, vector<1x8x128xf32>,
      %69 = vector.shape_cast %60 : vector<8x1xi1> to vector<8x1xi1>
      %70 = vector.broadcast %69 : vector<8x1xi1> to vector<8x128xi1>
      %71 = arith.select %70, %57, %25 : vector<8x128xi1>, vector<8x128xf32>
      %c1_i32 = arith.constant 1 : i32
      %72 = arith.index_cast %c1_i32 : i32 to index
      %c0_30 = arith.constant 0 : index
      %c0_31 = arith.constant 0 : index
      %73 = vector.load %arg10[%72, %c0_30, %c0_31] : memref<8x8x384xf32, #tpu.memory_space<vmem>>, vector<1x8x384xf32>
      %74 = vector.shape_cast %73 : vector<1x8x384xf32> to vector<8x384xf32>
      %cst_32 = arith.constant dense<0.000000e+00> : vector<8x384xf32>
      %75 = tpu.matmul %71, %22, %cst_32 {dimension_numbers = #tpu.dot_dimension_numbers<[1], [0], [0], [1], [0, 0, 1, 1], [], []>} : vector<8x128xf32>, vector<128x384xf32>, vector<8x384xf32> -> vector<8x384xf32>
      %76 = vector.broadcast %23 : vector<1x384xf32> to vector<8x384xf32>
      %77 = arith.addf %75, %76 : vector<8x384xf32>
      %78 = vector.extract_strided_slice %74 {offsets = [0, 0], sizes = [8, 128], strides = [1, 1]} : vector<8x384xf32> to vector<8x128xf32>
      %79 = vector.extract_strided_slice %77 {offsets = [0, 0], sizes = [8, 128], strides = [1, 1]} : vector<8x384xf32> to vector<8x128xf32>
      %80 = arith.addf %78, %79 : vector<8x128xf32>
      %81 = arith.negf %80 : vector<8x128xf32>
      %82 = math.exp %81 : vector<8x128xf32>
      %cst_33 = arith.constant 1.000000e+00 : f32
      %83 = vector.broadcast %cst_33 : f32 to vector<8x128xf32>
      %84 = arith.addf %83, %82 : vector<8x128xf32>
      %85 = arith.divf %83, %84 : vector<8x128xf32>
      %86 = vector.extract_strided_slice %74 {offsets = [0, 128], sizes = [8, 128], strides = [1, 1]} : vector<8x384xf32> to vector<8x128xf32>
      %87 = vector.extract_strided_slice %77 {offsets = [0, 128], sizes = [8, 128], strides = [1, 1]} : vector<8x384xf32> to vector<8x128xf32>
      %88 = arith.addf %86, %87 : vector<8x128xf32>
      %89 = arith.negf %88 : vector<8x128xf32>
      %90 = math.exp %89 : vector<8x128xf32>
      %cst_34 = arith.constant 1.000000e+00 : f32
      %91 = vector.broadcast %cst_34 : f32 to vector<8x128xf32>
      %92 = arith.addf %91, %90 : vector<8x128xf32>
      %93 = arith.divf %91, %92 : vector<8x128xf32>
      %94 = vector.extract_strided_slice %74 {offsets = [0, 256], sizes = [8, 128], strides = [1, 1]} : vector<8x384xf32> to vector<8x128xf32>
      %95 = vector.extract_strided_slice %77 {offsets = [0, 256], sizes = [8, 128], strides = [1, 1]} : vector<8x384xf32> to vector<8x128xf32>
      %96 = arith.mulf %85, %95 : vector<8x128xf32>
      %97 = arith.addf %94, %96 : vector<8x128xf32>
      %98 = math.tanh %97 : vector<8x128xf32>
      %cst_35 = arith.constant 1.000000e+00 : f32
      %99 = vector.broadcast %cst_35 : f32 to vector<8x128xf32>
      %100 = arith.subf %99, %93 : vector<8x128xf32>
      %101 = arith.mulf %100, %98 : vector<8x128xf32>
      %102 = arith.mulf %93, %71 : vector<8x128xf32>
      %103 = arith.addf %101, %102 : vector<8x128xf32>
      %104 = arith.addi %0, %c1_i32 : i32
      %105 = vector.broadcast %104 : i32 to vector<8x1xi32>
      %106 = arith.cmpi sgt, %24, %105 : vector<8x1xi32>
      %cst_36 = arith.constant 0.000000e+00 : f32
      %107 = vector.shape_cast %106 : vector<8x1xi1> to vector<8x1xi1>
      %108 = vector.broadcast %107 : vector<8x1xi1> to vector<8x128xi1>
      %109 = vector.broadcast %cst_36 : f32 to vector<8x128xf32>
      %110 = arith.select %108, %103, %109 : vector<8x128xi1>, vector<8x128xf32>
      %111 = arith.index_cast %c1_i32 : i32 to index
      %c0_37 = arith.constant 0 : index
      %c0_38 = arith.constant 0 : index
      %112 = vector.load %arg11[%111, %c0_37, %c0_38] : memref<8x8x128xf32, #tpu.memory_space<vmem>>, vector<1x8x128xf32>
      %113 = vector.shape_cast %112 : vector<1x8x128xf32> to vector<8x128xf32>
      %114 = vector.shape_cast %110 : vector<8x128xf32> to vector<1x8x128xf32>
      tpu.vector_store %arg11[%111, %c0_37, %c0_38], %114 {strides = array<i32>} : memref<8x8x128xf32, #tpu.memory_space<vmem>>, vector<1x8x128xf32>,
      %115 = vector.shape_cast %106 : vector<8x1xi1> to vector<8x1xi1>
      %116 = vector.broadcast %115 : vector<8x1xi1> to vector<8x128xi1>
      %117 = arith.select %116, %103, %71 : vector<8x128xi1>, vector<8x128xf32>
      %c2_i32 = arith.constant 2 : i32
      %118 = arith.index_cast %c2_i32 : i32 to index
      %c0_39 = arith.constant 0 : index
      %c0_40 = arith.constant 0 : index
      %119 = vector.load %arg10[%118, %c0_39, %c0_40] : memref<8x8x384xf32, #tpu.memory_space<vmem>>, vector<1x8x384xf32>
      %120 = vector.shape_cast %119 : vector<1x8x384xf32> to vector<8x384xf32>
      %cst_41 = arith.constant dense<0.000000e+00> : vector<8x384xf32>
      %121 = tpu.matmul %117, %22, %cst_41 {dimension_numbers = #tpu.dot_dimension_numbers<[1], [0], [0], [1], [0, 0, 1, 1], [], []>} : vector<8x128xf32>, vector<128x384xf32>, vector<8x384xf32> -> vector<8x384xf32>
      %122 = vector.broadcast %23 : vector<1x384xf32> to vector<8x384xf32>
      %123 = arith.addf %121, %122 : vector<8x384xf32>
      %124 = vector.extract_strided_slice %120 {offsets = [0, 0], sizes = [8, 128], strides = [1, 1]} : vector<8x384xf32> to vector<8x128xf32>
      %125 = vector.extract_strided_slice %123 {offsets = [0, 0], sizes = [8, 128], strides = [1, 1]} : vector<8x384xf32> to vector<8x128xf32>
      %126 = arith.addf %124, %125 : vector<8x128xf32>
      %127 = arith.negf %126 : vector<8x128xf32>
      %128 = math.exp %127 : vector<8x128xf32>
      %cst_42 = arith.constant 1.000000e+00 : f32
      %129 = vector.broadcast %cst_42 : f32 to vector<8x128xf32>
      %130 = arith.addf %129, %128 : vector<8x128xf32>
      %131 = arith.divf %129, %130 : vector<8x128xf32>
      %132 = vector.extract_strided_slice %120 {offsets = [0, 128], sizes = [8, 128], strides = [1, 1]} : vector<8x384xf32> to vector<8x128xf32>
      %133 = vector.extract_strided_slice %123 {offsets = [0, 128], sizes = [8, 128], strides = [1, 1]} : vector<8x384xf32> to vector<8x128xf32>
      %134 = arith.addf %132, %133 : vector<8x128xf32>
      %135 = arith.negf %134 : vector<8x128xf32>
      %136 = math.exp %135 : vector<8x128xf32>
      %cst_43 = arith.constant 1.000000e+00 : f32
      %137 = vector.broadcast %cst_43 : f32 to vector<8x128xf32>
      %138 = arith.addf %137, %136 : vector<8x128xf32>
      %139 = arith.divf %137, %138 : vector<8x128xf32>
      %140 = vector.extract_strided_slice %120 {offsets = [0, 256], sizes = [8, 128], strides = [1, 1]} : vector<8x384xf32> to vector<8x128xf32>
      %141 = vector.extract_strided_slice %123 {offsets = [0, 256], sizes = [8, 128], strides = [1, 1]} : vector<8x384xf32> to vector<8x128xf32>
      %142 = arith.mulf %131, %141 : vector<8x128xf32>
      %143 = arith.addf %140, %142 : vector<8x128xf32>
      %144 = math.tanh %143 : vector<8x128xf32>
      %cst_44 = arith.constant 1.000000e+00 : f32
      %145 = vector.broadcast %cst_44 : f32 to vector<8x128xf32>
      %146 = arith.subf %145, %139 : vector<8x128xf32>
      %147 = arith.mulf %146, %144 : vector<8x128xf32>
      %148 = arith.mulf %139, %117 : vector<8x128xf32>
      %149 = arith.addf %147, %148 : vector<8x128xf32>
      %150 = arith.addi %0, %c2_i32 : i32
      %151 = vector.broadcast %150 : i32 to vector<8x1xi32>
      %152 = arith.cmpi sgt, %24, %151 : vector<8x1xi32>
      %cst_45 = arith.constant 0.000000e+00 : f32
      %153 = vector.shape_cast %152 : vector<8x1xi1> to vector<8x1xi1>
      %154 = vector.broadcast %153 : vector<8x1xi1> to vector<8x128xi1>
      %155 = vector.broadcast %cst_45 : f32 to vector<8x128xf32>
      %156 = arith.select %154, %149, %155 : vector<8x128xi1>, vector<8x128xf32>
      %157 = arith.index_cast %c2_i32 : i32 to index
      %c0_46 = arith.constant 0 : index
      %c0_47 = arith.constant 0 : index
      %158 = vector.load %arg11[%157, %c0_46, %c0_47] : memref<8x8x128xf32, #tpu.memory_space<vmem>>, vector<1x8x128xf32>
      %159 = vector.shape_cast %158 : vector<1x8x128xf32> to vector<8x128xf32>
      %160 = vector.shape_cast %156 : vector<8x128xf32> to vector<1x8x128xf32>
      tpu.vector_store %arg11[%157, %c0_46, %c0_47], %160 {strides = array<i32>} : memref<8x8x128xf32, #tpu.memory_space<vmem>>, vector<1x8x128xf32>,
      %161 = vector.shape_cast %152 : vector<8x1xi1> to vector<8x1xi1>
      %162 = vector.broadcast %161 : vector<8x1xi1> to vector<8x128xi1>
      %163 = arith.select %162, %149, %117 : vector<8x128xi1>, vector<8x128xf32>
      %c3_i32 = arith.constant 3 : i32
      %164 = arith.index_cast %c3_i32 : i32 to index
      %c0_48 = arith.constant 0 : index
      %c0_49 = arith.constant 0 : index
      %165 = vector.load %arg10[%164, %c0_48, %c0_49] : memref<8x8x384xf32, #tpu.memory_space<vmem>>, vector<1x8x384xf32>
      %166 = vector.shape_cast %165 : vector<1x8x384xf32> to vector<8x384xf32>
      %cst_50 = arith.constant dense<0.000000e+00> : vector<8x384xf32>
      %167 = tpu.matmul %163, %22, %cst_50 {dimension_numbers = #tpu.dot_dimension_numbers<[1], [0], [0], [1], [0, 0, 1, 1], [], []>} : vector<8x128xf32>, vector<128x384xf32>, vector<8x384xf32> -> vector<8x384xf32>
      %168 = vector.broadcast %23 : vector<1x384xf32> to vector<8x384xf32>
      %169 = arith.addf %167, %168 : vector<8x384xf32>
      %170 = vector.extract_strided_slice %166 {offsets = [0, 0], sizes = [8, 128], strides = [1, 1]} : vector<8x384xf32> to vector<8x128xf32>
      %171 = vector.extract_strided_slice %169 {offsets = [0, 0], sizes = [8, 128], strides = [1, 1]} : vector<8x384xf32> to vector<8x128xf32>
      %172 = arith.addf %170, %171 : vector<8x128xf32>
      %173 = arith.negf %172 : vector<8x128xf32>
      %174 = math.exp %173 : vector<8x128xf32>
      %cst_51 = arith.constant 1.000000e+00 : f32
      %175 = vector.broadcast %cst_51 : f32 to vector<8x128xf32>
      %176 = arith.addf %175, %174 : vector<8x128xf32>
      %177 = arith.divf %175, %176 : vector<8x128xf32>
      %178 = vector.extract_strided_slice %166 {offsets = [0, 128], sizes = [8, 128], strides = [1, 1]} : vector<8x384xf32> to vector<8x128xf32>
      %179 = vector.extract_strided_slice %169 {offsets = [0, 128], sizes = [8, 128], strides = [1, 1]} : vector<8x384xf32> to vector<8x128xf32>
      %180 = arith.addf %178, %179 : vector<8x128xf32>
      %181 = arith.negf %180 : vector<8x128xf32>
      %182 = math.exp %181 : vector<8x128xf32>
      %cst_52 = arith.constant 1.000000e+00 : f32
      %183 = vector.broadcast %cst_52 : f32 to vector<8x128xf32>
      %184 = arith.addf %183, %182 : vector<8x128xf32>
      %185 = arith.divf %183, %184 : vector<8x128xf32>
      %186 = vector.extract_strided_slice %166 {offsets = [0, 256], sizes = [8, 128], strides = [1, 1]} : vector<8x384xf32> to vector<8x128xf32>
      %187 = vector.extract_strided_slice %169 {offsets = [0, 256], sizes = [8, 128], strides = [1, 1]} : vector<8x384xf32> to vector<8x128xf32>
      %188 = arith.mulf %177, %187 : vector<8x128xf32>
      %189 = arith.addf %186, %188 : vector<8x128xf32>
      %190 = math.tanh %189 : vector<8x128xf32>
      %cst_53 = arith.constant 1.000000e+00 : f32
      %191 = vector.broadcast %cst_53 : f32 to vector<8x128xf32>
      %192 = arith.subf %191, %185 : vector<8x128xf32>
      %193 = arith.mulf %192, %190 : vector<8x128xf32>
      %194 = arith.mulf %185, %163 : vector<8x128xf32>
      %195 = arith.addf %193, %194 : vector<8x128xf32>
      %196 = arith.addi %0, %c3_i32 : i32
      %197 = vector.broadcast %196 : i32 to vector<8x1xi32>
      %198 = arith.cmpi sgt, %24, %197 : vector<8x1xi32>
      %cst_54 = arith.constant 0.000000e+00 : f32
      %199 = vector.shape_cast %198 : vector<8x1xi1> to vector<8x1xi1>
      %200 = vector.broadcast %199 : vector<8x1xi1> to vector<8x128xi1>
      %201 = vector.broadcast %cst_54 : f32 to vector<8x128xf32>
      %202 = arith.select %200, %195, %201 : vector<8x128xi1>, vector<8x128xf32>
      %203 = arith.index_cast %c3_i32 : i32 to index
      %c0_55 = arith.constant 0 : index
      %c0_56 = arith.constant 0 : index
      %204 = vector.load %arg11[%203, %c0_55, %c0_56] : memref<8x8x128xf32, #tpu.memory_space<vmem>>, vector<1x8x128xf32>
      %205 = vector.shape_cast %204 : vector<1x8x128xf32> to vector<8x128xf32>
      %206 = vector.shape_cast %202 : vector<8x128xf32> to vector<1x8x128xf32>
      tpu.vector_store %arg11[%203, %c0_55, %c0_56], %206 {strides = array<i32>} : memref<8x8x128xf32, #tpu.memory_space<vmem>>, vector<1x8x128xf32>,
      %207 = vector.shape_cast %198 : vector<8x1xi1> to vector<8x1xi1>
      %208 = vector.broadcast %207 : vector<8x1xi1> to vector<8x128xi1>
      %209 = arith.select %208, %195, %163 : vector<8x128xi1>, vector<8x128xf32>
      %c4_i32 = arith.constant 4 : i32
      %210 = arith.index_cast %c4_i32 : i32 to index
      %c0_57 = arith.constant 0 : index
      %c0_58 = arith.constant 0 : index
      %211 = vector.load %arg10[%210, %c0_57, %c0_58] : memref<8x8x384xf32, #tpu.memory_space<vmem>>, vector<1x8x384xf32>
      %212 = vector.shape_cast %211 : vector<1x8x384xf32> to vector<8x384xf32>
      %cst_59 = arith.constant dense<0.000000e+00> : vector<8x384xf32>
      %213 = tpu.matmul %209, %22, %cst_59 {dimension_numbers = #tpu.dot_dimension_numbers<[1], [0], [0], [1], [0, 0, 1, 1], [], []>} : vector<8x128xf32>, vector<128x384xf32>, vector<8x384xf32> -> vector<8x384xf32>
      %214 = vector.broadcast %23 : vector<1x384xf32> to vector<8x384xf32>
      %215 = arith.addf %213, %214 : vector<8x384xf32>
      %216 = vector.extract_strided_slice %212 {offsets = [0, 0], sizes = [8, 128], strides = [1, 1]} : vector<8x384xf32> to vector<8x128xf32>
      %217 = vector.extract_strided_slice %215 {offsets = [0, 0], sizes = [8, 128], strides = [1, 1]} : vector<8x384xf32> to vector<8x128xf32>
      %218 = arith.addf %216, %217 : vector<8x128xf32>
      %219 = arith.negf %218 : vector<8x128xf32>
      %220 = math.exp %219 : vector<8x128xf32>
      %cst_60 = arith.constant 1.000000e+00 : f32
      %221 = vector.broadcast %cst_60 : f32 to vector<8x128xf32>
      %222 = arith.addf %221, %220 : vector<8x128xf32>
      %223 = arith.divf %221, %222 : vector<8x128xf32>
      %224 = vector.extract_strided_slice %212 {offsets = [0, 128], sizes = [8, 128], strides = [1, 1]} : vector<8x384xf32> to vector<8x128xf32>
      %225 = vector.extract_strided_slice %215 {offsets = [0, 128], sizes = [8, 128], strides = [1, 1]} : vector<8x384xf32> to vector<8x128xf32>
      %226 = arith.addf %224, %225 : vector<8x128xf32>
      %227 = arith.negf %226 : vector<8x128xf32>
      %228 = math.exp %227 : vector<8x128xf32>
      %cst_61 = arith.constant 1.000000e+00 : f32
      %229 = vector.broadcast %cst_61 : f32 to vector<8x128xf32>
      %230 = arith.addf %229, %228 : vector<8x128xf32>
      %231 = arith.divf %229, %230 : vector<8x128xf32>
      %232 = vector.extract_strided_slice %212 {offsets = [0, 256], sizes = [8, 128], strides = [1, 1]} : vector<8x384xf32> to vector<8x128xf32>
      %233 = vector.extract_strided_slice %215 {offsets = [0, 256], sizes = [8, 128], strides = [1, 1]} : vector<8x384xf32> to vector<8x128xf32>
      %234 = arith.mulf %223, %233 : vector<8x128xf32>
      %235 = arith.addf %232, %234 : vector<8x128xf32>
      %236 = math.tanh %235 : vector<8x128xf32>
      %cst_62 = arith.constant 1.000000e+00 : f32
      %237 = vector.broadcast %cst_62 : f32 to vector<8x128xf32>
      %238 = arith.subf %237, %231 : vector<8x128xf32>
      %239 = arith.mulf %238, %236 : vector<8x128xf32>
      %240 = arith.mulf %231, %209 : vector<8x128xf32>
      %241 = arith.addf %239, %240 : vector<8x128xf32>
      %242 = arith.addi %0, %c4_i32 : i32
      %243 = vector.broadcast %242 : i32 to vector<8x1xi32>
      %244 = arith.cmpi sgt, %24, %243 : vector<8x1xi32>
      %cst_63 = arith.constant 0.000000e+00 : f32
      %245 = vector.shape_cast %244 : vector<8x1xi1> to vector<8x1xi1>
      %246 = vector.broadcast %245 : vector<8x1xi1> to vector<8x128xi1>
      %247 = vector.broadcast %cst_63 : f32 to vector<8x128xf32>
      %248 = arith.select %246, %241, %247 : vector<8x128xi1>, vector<8x128xf32>
      %249 = arith.index_cast %c4_i32 : i32 to index
      %c0_64 = arith.constant 0 : index
      %c0_65 = arith.constant 0 : index
      %250 = vector.load %arg11[%249, %c0_64, %c0_65] : memref<8x8x128xf32, #tpu.memory_space<vmem>>, vector<1x8x128xf32>
      %251 = vector.shape_cast %250 : vector<1x8x128xf32> to vector<8x128xf32>
      %252 = vector.shape_cast %248 : vector<8x128xf32> to vector<1x8x128xf32>
      tpu.vector_store %arg11[%249, %c0_64, %c0_65], %252 {strides = array<i32>} : memref<8x8x128xf32, #tpu.memory_space<vmem>>, vector<1x8x128xf32>,
      %253 = vector.shape_cast %244 : vector<8x1xi1> to vector<8x1xi1>
      %254 = vector.broadcast %253 : vector<8x1xi1> to vector<8x128xi1>
      %255 = arith.select %254, %241, %209 : vector<8x128xi1>, vector<8x128xf32>
      %c5_i32 = arith.constant 5 : i32
      %256 = arith.index_cast %c5_i32 : i32 to index
      %c0_66 = arith.constant 0 : index
      %c0_67 = arith.constant 0 : index
      %257 = vector.load %arg10[%256, %c0_66, %c0_67] : memref<8x8x384xf32, #tpu.memory_space<vmem>>, vector<1x8x384xf32>
      %258 = vector.shape_cast %257 : vector<1x8x384xf32> to vector<8x384xf32>
      %cst_68 = arith.constant dense<0.000000e+00> : vector<8x384xf32>
      %259 = tpu.matmul %255, %22, %cst_68 {dimension_numbers = #tpu.dot_dimension_numbers<[1], [0], [0], [1], [0, 0, 1, 1], [], []>} : vector<8x128xf32>, vector<128x384xf32>, vector<8x384xf32> -> vector<8x384xf32>
      %260 = vector.broadcast %23 : vector<1x384xf32> to vector<8x384xf32>
      %261 = arith.addf %259, %260 : vector<8x384xf32>
      %262 = vector.extract_strided_slice %258 {offsets = [0, 0], sizes = [8, 128], strides = [1, 1]} : vector<8x384xf32> to vector<8x128xf32>
      %263 = vector.extract_strided_slice %261 {offsets = [0, 0], sizes = [8, 128], strides = [1, 1]} : vector<8x384xf32> to vector<8x128xf32>
      %264 = arith.addf %262, %263 : vector<8x128xf32>
      %265 = arith.negf %264 : vector<8x128xf32>
      %266 = math.exp %265 : vector<8x128xf32>
      %cst_69 = arith.constant 1.000000e+00 : f32
      %267 = vector.broadcast %cst_69 : f32 to vector<8x128xf32>
      %268 = arith.addf %267, %266 : vector<8x128xf32>
      %269 = arith.divf %267, %268 : vector<8x128xf32>
      %270 = vector.extract_strided_slice %258 {offsets = [0, 128], sizes = [8, 128], strides = [1, 1]} : vector<8x384xf32> to vector<8x128xf32>
      %271 = vector.extract_strided_slice %261 {offsets = [0, 128], sizes = [8, 128], strides = [1, 1]} : vector<8x384xf32> to vector<8x128xf32>
      %272 = arith.addf %270, %271 : vector<8x128xf32>
      %273 = arith.negf %272 : vector<8x128xf32>
      %274 = math.exp %273 : vector<8x128xf32>
      %cst_70 = arith.constant 1.000000e+00 : f32
      %275 = vector.broadcast %cst_70 : f32 to vector<8x128xf32>
      %276 = arith.addf %275, %274 : vector<8x128xf32>
      %277 = arith.divf %275, %276 : vector<8x128xf32>
      %278 = vector.extract_strided_slice %258 {offsets = [0, 256], sizes = [8, 128], strides = [1, 1]} : vector<8x384xf32> to vector<8x128xf32>
      %279 = vector.extract_strided_slice %261 {offsets = [0, 256], sizes = [8, 128], strides = [1, 1]} : vector<8x384xf32> to vector<8x128xf32>
      %280 = arith.mulf %269, %279 : vector<8x128xf32>
      %281 = arith.addf %278, %280 : vector<8x128xf32>
      %282 = math.tanh %281 : vector<8x128xf32>
      %cst_71 = arith.constant 1.000000e+00 : f32
      %283 = vector.broadcast %cst_71 : f32 to vector<8x128xf32>
      %284 = arith.subf %283, %277 : vector<8x128xf32>
      %285 = arith.mulf %284, %282 : vector<8x128xf32>
      %286 = arith.mulf %277, %255 : vector<8x128xf32>
      %287 = arith.addf %285, %286 : vector<8x128xf32>
      %288 = arith.addi %0, %c5_i32 : i32
      %289 = vector.broadcast %288 : i32 to vector<8x1xi32>
      %290 = arith.cmpi sgt, %24, %289 : vector<8x1xi32>
      %cst_72 = arith.constant 0.000000e+00 : f32
      %291 = vector.shape_cast %290 : vector<8x1xi1> to vector<8x1xi1>
      %292 = vector.broadcast %291 : vector<8x1xi1> to vector<8x128xi1>
      %293 = vector.broadcast %cst_72 : f32 to vector<8x128xf32>
      %294 = arith.select %292, %287, %293 : vector<8x128xi1>, vector<8x128xf32>
      %295 = arith.index_cast %c5_i32 : i32 to index
      %c0_73 = arith.constant 0 : index
      %c0_74 = arith.constant 0 : index
      %296 = vector.load %arg11[%295, %c0_73, %c0_74] : memref<8x8x128xf32, #tpu.memory_space<vmem>>, vector<1x8x128xf32>
      %297 = vector.shape_cast %296 : vector<1x8x128xf32> to vector<8x128xf32>
      %298 = vector.shape_cast %294 : vector<8x128xf32> to vector<1x8x128xf32>
      tpu.vector_store %arg11[%295, %c0_73, %c0_74], %298 {strides = array<i32>} : memref<8x8x128xf32, #tpu.memory_space<vmem>>, vector<1x8x128xf32>,
      %299 = vector.shape_cast %290 : vector<8x1xi1> to vector<8x1xi1>
      %300 = vector.broadcast %299 : vector<8x1xi1> to vector<8x128xi1>
      %301 = arith.select %300, %287, %255 : vector<8x128xi1>, vector<8x128xf32>
      %c6_i32 = arith.constant 6 : i32
      %302 = arith.index_cast %c6_i32 : i32 to index
      %c0_75 = arith.constant 0 : index
      %c0_76 = arith.constant 0 : index
      %303 = vector.load %arg10[%302, %c0_75, %c0_76] : memref<8x8x384xf32, #tpu.memory_space<vmem>>, vector<1x8x384xf32>
      %304 = vector.shape_cast %303 : vector<1x8x384xf32> to vector<8x384xf32>
      %cst_77 = arith.constant dense<0.000000e+00> : vector<8x384xf32>
      %305 = tpu.matmul %301, %22, %cst_77 {dimension_numbers = #tpu.dot_dimension_numbers<[1], [0], [0], [1], [0, 0, 1, 1], [], []>} : vector<8x128xf32>, vector<128x384xf32>, vector<8x384xf32> -> vector<8x384xf32>
      %306 = vector.broadcast %23 : vector<1x384xf32> to vector<8x384xf32>
      %307 = arith.addf %305, %306 : vector<8x384xf32>
      %308 = vector.extract_strided_slice %304 {offsets = [0, 0], sizes = [8, 128], strides = [1, 1]} : vector<8x384xf32> to vector<8x128xf32>
      %309 = vector.extract_strided_slice %307 {offsets = [0, 0], sizes = [8, 128], strides = [1, 1]} : vector<8x384xf32> to vector<8x128xf32>
      %310 = arith.addf %308, %309 : vector<8x128xf32>
      %311 = arith.negf %310 : vector<8x128xf32>
      %312 = math.exp %311 : vector<8x128xf32>
      %cst_78 = arith.constant 1.000000e+00 : f32
      %313 = vector.broadcast %cst_78 : f32 to vector<8x128xf32>
      %314 = arith.addf %313, %312 : vector<8x128xf32>
      %315 = arith.divf %313, %314 : vector<8x128xf32>
      %316 = vector.extract_strided_slice %304 {offsets = [0, 128], sizes = [8, 128], strides = [1, 1]} : vector<8x384xf32> to vector<8x128xf32>
      %317 = vector.extract_strided_slice %307 {offsets = [0, 128], sizes = [8, 128], strides = [1, 1]} : vector<8x384xf32> to vector<8x128xf32>
      %318 = arith.addf %316, %317 : vector<8x128xf32>
      %319 = arith.negf %318 : vector<8x128xf32>
      %320 = math.exp %319 : vector<8x128xf32>
      %cst_79 = arith.constant 1.000000e+00 : f32
      %321 = vector.broadcast %cst_79 : f32 to vector<8x128xf32>
      %322 = arith.addf %321, %320 : vector<8x128xf32>
      %323 = arith.divf %321, %322 : vector<8x128xf32>
      %324 = vector.extract_strided_slice %304 {offsets = [0, 256], sizes = [8, 128], strides = [1, 1]} : vector<8x384xf32> to vector<8x128xf32>
      %325 = vector.extract_strided_slice %307 {offsets = [0, 256], sizes = [8, 128], strides = [1, 1]} : vector<8x384xf32> to vector<8x128xf32>
      %326 = arith.mulf %315, %325 : vector<8x128xf32>
      %327 = arith.addf %324, %326 : vector<8x128xf32>
      %328 = math.tanh %327 : vector<8x128xf32>
      %cst_80 = arith.constant 1.000000e+00 : f32
      %329 = vector.broadcast %cst_80 : f32 to vector<8x128xf32>
      %330 = arith.subf %329, %323 : vector<8x128xf32>
      %331 = arith.mulf %330, %328 : vector<8x128xf32>
      %332 = arith.mulf %323, %301 : vector<8x128xf32>
      %333 = arith.addf %331, %332 : vector<8x128xf32>
      %334 = arith.addi %0, %c6_i32 : i32
      %335 = vector.broadcast %334 : i32 to vector<8x1xi32>
      %336 = arith.cmpi sgt, %24, %335 : vector<8x1xi32>
      %cst_81 = arith.constant 0.000000e+00 : f32
      %337 = vector.shape_cast %336 : vector<8x1xi1> to vector<8x1xi1>
      %338 = vector.broadcast %337 : vector<8x1xi1> to vector<8x128xi1>
      %339 = vector.broadcast %cst_81 : f32 to vector<8x128xf32>
      %340 = arith.select %338, %333, %339 : vector<8x128xi1>, vector<8x128xf32>
      %341 = arith.index_cast %c6_i32 : i32 to index
      %c0_82 = arith.constant 0 : index
      %c0_83 = arith.constant 0 : index
      %342 = vector.load %arg11[%341, %c0_82, %c0_83] : memref<8x8x128xf32, #tpu.memory_space<vmem>>, vector<1x8x128xf32>
      %343 = vector.shape_cast %342 : vector<1x8x128xf32> to vector<8x128xf32>
      %344 = vector.shape_cast %340 : vector<8x128xf32> to vector<1x8x128xf32>
      tpu.vector_store %arg11[%341, %c0_82, %c0_83], %344 {strides = array<i32>} : memref<8x8x128xf32, #tpu.memory_space<vmem>>, vector<1x8x128xf32>,
      %345 = vector.shape_cast %336 : vector<8x1xi1> to vector<8x1xi1>
      %346 = vector.broadcast %345 : vector<8x1xi1> to vector<8x128xi1>
      %347 = arith.select %346, %333, %301 : vector<8x128xi1>, vector<8x128xf32>
      %c7_i32 = arith.constant 7 : i32
      %348 = arith.index_cast %c7_i32 : i32 to index
      %c0_84 = arith.constant 0 : index
      %c0_85 = arith.constant 0 : index
      %349 = vector.load %arg10[%348, %c0_84, %c0_85] : memref<8x8x384xf32, #tpu.memory_space<vmem>>, vector<1x8x384xf32>
      %350 = vector.shape_cast %349 : vector<1x8x384xf32> to vector<8x384xf32>
      %cst_86 = arith.constant dense<0.000000e+00> : vector<8x384xf32>
      %351 = tpu.matmul %347, %22, %cst_86 {dimension_numbers = #tpu.dot_dimension_numbers<[1], [0], [0], [1], [0, 0, 1, 1], [], []>} : vector<8x128xf32>, vector<128x384xf32>, vector<8x384xf32> -> vector<8x384xf32>
      %352 = vector.broadcast %23 : vector<1x384xf32> to vector<8x384xf32>
      %353 = arith.addf %351, %352 : vector<8x384xf32>
      %354 = vector.extract_strided_slice %350 {offsets = [0, 0], sizes = [8, 128], strides = [1, 1]} : vector<8x384xf32> to vector<8x128xf32>
      %355 = vector.extract_strided_slice %353 {offsets = [0, 0], sizes = [8, 128], strides = [1, 1]} : vector<8x384xf32> to vector<8x128xf32>
      %356 = arith.addf %354, %355 : vector<8x128xf32>
      %357 = arith.negf %356 : vector<8x128xf32>
      %358 = math.exp %357 : vector<8x128xf32>
      %cst_87 = arith.constant 1.000000e+00 : f32
      %359 = vector.broadcast %cst_87 : f32 to vector<8x128xf32>
      %360 = arith.addf %359, %358 : vector<8x128xf32>
      %361 = arith.divf %359, %360 : vector<8x128xf32>
      %362 = vector.extract_strided_slice %350 {offsets = [0, 128], sizes = [8, 128], strides = [1, 1]} : vector<8x384xf32> to vector<8x128xf32>
      %363 = vector.extract_strided_slice %353 {offsets = [0, 128], sizes = [8, 128], strides = [1, 1]} : vector<8x384xf32> to vector<8x128xf32>
      %364 = arith.addf %362, %363 : vector<8x128xf32>
      %365 = arith.negf %364 : vector<8x128xf32>
      %366 = math.exp %365 : vector<8x128xf32>
      %cst_88 = arith.constant 1.000000e+00 : f32
      %367 = vector.broadcast %cst_88 : f32 to vector<8x128xf32>
      %368 = arith.addf %367, %366 : vector<8x128xf32>
      %369 = arith.divf %367, %368 : vector<8x128xf32>
      %370 = vector.extract_strided_slice %350 {offsets = [0, 256], sizes = [8, 128], strides = [1, 1]} : vector<8x384xf32> to vector<8x128xf32>
      %371 = vector.extract_strided_slice %353 {offsets = [0, 256], sizes = [8, 128], strides = [1, 1]} : vector<8x384xf32> to vector<8x128xf32>
      %372 = arith.mulf %361, %371 : vector<8x128xf32>
      %373 = arith.addf %370, %372 : vector<8x128xf32>
      %374 = math.tanh %373 : vector<8x128xf32>
      %cst_89 = arith.constant 1.000000e+00 : f32
      %375 = vector.broadcast %cst_89 : f32 to vector<8x128xf32>
      %376 = arith.subf %375, %369 : vector<8x128xf32>
      %377 = arith.mulf %376, %374 : vector<8x128xf32>
      %378 = arith.mulf %369, %347 : vector<8x128xf32>
      %379 = arith.addf %377, %378 : vector<8x128xf32>
      %380 = arith.addi %0, %c7_i32 : i32
      %381 = vector.broadcast %380 : i32 to vector<8x1xi32>
      %382 = arith.cmpi sgt, %24, %381 : vector<8x1xi32>
      %cst_90 = arith.constant 0.000000e+00 : f32
      %383 = vector.shape_cast %382 : vector<8x1xi1> to vector<8x1xi1>
      %384 = vector.broadcast %383 : vector<8x1xi1> to vector<8x128xi1>
      %385 = vector.broadcast %cst_90 : f32 to vector<8x128xf32>
      %386 = arith.select %384, %379, %385 : vector<8x128xi1>, vector<8x128xf32>
      %387 = arith.index_cast %c7_i32 : i32 to index
      %c0_91 = arith.constant 0 : index
      %c0_92 = arith.constant 0 : index
      %388 = vector.load %arg11[%387, %c0_91, %c0_92] : memref<8x8x128xf32, #tpu.memory_space<vmem>>, vector<1x8x128xf32>
      %389 = vector.shape_cast %388 : vector<1x8x128xf32> to vector<8x128xf32>
      %390 = vector.shape_cast %386 : vector<8x128xf32> to vector<1x8x128xf32>
      tpu.vector_store %arg11[%387, %c0_91, %c0_92], %390 {strides = array<i32>} : memref<8x8x128xf32, #tpu.memory_space<vmem>>, vector<1x8x128xf32>,
      %391 = vector.shape_cast %382 : vector<8x1xi1> to vector<8x1xi1>
      %392 = vector.broadcast %391 : vector<8x1xi1> to vector<8x128xi1>
      %393 = arith.select %392, %379, %347 : vector<8x128xi1>, vector<8x128xf32>
      %c8_i32_93 = arith.constant 8 : i32
      %c0_94 = arith.constant 0 : index
      %c0_95 = arith.constant 0 : index
      %394 = vector.load %arg12[%c0_94, %c0_95] : memref<8x128xf32, #tpu.memory_space<vmem>>, vector<8x128xf32>
      tpu.vector_store %arg12[%c0_94, %c0_95], %393 {strides = array<i32>} : memref<8x128xf32, #tpu.memory_space<vmem>>, vector<8x128xf32>,
      %c0_96 = arith.constant 0 : index
      %c0_97 = arith.constant 0 : index
      %c0_98 = arith.constant 0 : index
      %395 = vector.load %arg11[%c0_96, %c0_97, %c0_98] : memref<8x8x128xf32, #tpu.memory_space<vmem>>, vector<8x8x128xf32>
      %396 = tpu.transpose %395, [1, 0, 2] : vector<8x8x128xf32> -> vector<8x8x128xf32>
      %397 = vector.extract_strided_slice %396 {offsets = [0, 0, 0], sizes = [8, 8, 32], strides = [1, 1, 1]} : vector<8x8x128xf32> to vector<8x8x32xf32>
      %c0_99 = arith.constant 0 : index
      %c0_100 = arith.constant 0 : index
      %c0_101 = arith.constant 0 : index
      %398 = vector.load %arg9[%c0_99, %c0_100, %c0_101] : memref<8x8x32xf32, #tpu.memory_space<vmem>>, vector<8x8x32xf32>
      tpu.vector_store %arg9[%c0_99, %c0_100, %c0_101], %397 {strides = array<i32>} : memref<8x8x32xf32, #tpu.memory_space<vmem>>, vector<8x8x32xf32>,
    } else {
    }
    return
  }
  func.func @transform_0(%arg0: i32, %arg1: i32, %arg2: memref<1xi32, #tpu.memory_space<smem>>) -> (i32, i32, i32) {
    %c0_i32 = arith.constant 0 : i32
    %c0_i32_0 = arith.constant 0 : i32
    return %arg0, %arg1, %c0_i32 : i32, i32, i32
  }
  func.func @transform_1(%arg0: i32, %arg1: i32, %arg2: memref<1xi32, #tpu.memory_space<smem>>) -> (i32, i32) {
    %c0_i32 = arith.constant 0 : i32
    %c0_i32_0 = arith.constant 0 : i32
    return %arg0, %c0_i32 : i32, i32
  }
  func.func @transform_2(%arg0: i32, %arg1: i32, %arg2: memref<1xi32, #tpu.memory_space<smem>>) -> (i32, i32) {
    %c0_i32 = arith.constant 0 : i32
    %c0_i32_0 = arith.constant 0 : i32
    %c0_i32_1 = arith.constant 0 : i32
    return %c0_i32, %c0_i32_0 : i32, i32
  }
  func.func @transform_3(%arg0: i32, %arg1: i32, %arg2: memref<1xi32, #tpu.memory_space<smem>>) -> (i32, i32) {
    %c0_i32 = arith.constant 0 : i32
    %c0_i32_0 = arith.constant 0 : i32
    %c0_i32_1 = arith.constant 0 : i32
    return %c0_i32, %c0_i32_0 : i32, i32
  }
  func.func @transform_4(%arg0: i32, %arg1: i32, %arg2: memref<1xi32, #tpu.memory_space<smem>>) -> (i32, i32) {
    %c0_i32 = arith.constant 0 : i32
    %c0_i32_0 = arith.constant 0 : i32
    %c0_i32_1 = arith.constant 0 : i32
    return %c0_i32, %c0_i32_0 : i32, i32
  }
  func.func @transform_5(%arg0: i32, %arg1: i32, %arg2: memref<1xi32, #tpu.memory_space<smem>>) -> (i32, i32) {
    %c0_i32 = arith.constant 0 : i32
    %c0_i32_0 = arith.constant 0 : i32
    %c0_i32_1 = arith.constant 0 : i32
    return %c0_i32, %c0_i32_0 : i32, i32
  }
  func.func @transform_6(%arg0: i32, %arg1: i32, %arg2: memref<1xi32, #tpu.memory_space<smem>>) -> (i32, i32, i32) {
    %c0_i32 = arith.constant 0 : i32
    %c0_i32_0 = arith.constant 0 : i32
    return %arg0, %arg1, %c0_i32 : i32, i32, i32
  }
}

</mosaic_0001>

<llo_original>
// kernel: gru_encoder_pallas.1
$region0: #{gru_encoder_pallas.1}
  #allocation0 [shape = 'u32[]', space=smem, size = 0x4, offset = 0x4, fixed_abs, tag = 'smem constant byte address 0x4 - core index']
  #allocation1 [shape = 'u32[144,128]{1,0:T(1,128)}', space=vmem, size = 0x12000, scoped, tag = 'internal scratch']
  #allocation2 [shape = 'f32[8,8,384]{2,1,0:T(8,128)}', space=vmem, size = 0x18000, scoped, tag = 'scratch operand']
  #allocation3 [shape = 'f32[8,8,128]{2,1,0:T(8,128)}', space=vmem, size = 0x8000, scoped, tag = 'scratch operand']
  #allocation4 [shape = 'f32[8,128]{1,0:T(8,128)}', space=vmem, size = 0x1000, scoped, tag = 'scratch operand']
  #allocation5 [shape = 's32[1]{0}', space=sflag, size = 0x4, scoped, tag = 'scoped memory for gru_encoder_pallas.1']
  #allocation6 [shape = 's32[1]{0:T(128)S(6)}', space=smem, size = 0x200, scoped, tag = 'prefetched SMEM operand 0']
  %s0 = inlined_call_operand.<no memory space> [shape: s32[1], index: 0, kind: input, shape index: {}]
  %s1 = inlined_call_operand.vmem [shape: f32[8,8,32], index: 1, kind: input, shape index: {}]
  %s2 = inlined_call_operand.vmem [shape: s32[8,1], index: 2, kind: input, shape index: {}]
  %s3 = inlined_call_operand.vmem [shape: f32[32,384], index: 3, kind: input, shape index: {}]
  %s4 = inlined_call_operand.vmem [shape: f32[128,384], index: 4, kind: input, shape index: {}]
  %s5 = inlined_call_operand.vmem [shape: f32[1,384], index: 5, kind: input, shape index: {}]
  %s6 = inlined_call_operand.vmem [shape: f32[1,384], index: 6, kind: input, shape index: {}]
  %s7 = inlined_call_operand.vmem [shape: f32[8,8,32], index: 7, kind: output, shape index: {}]
  %s8 = sld [smem:[#allocation0]]
  $region46: #{gru_encoder_pallas.1} parent=0
    _
  %s10 = ssub.s32 1, %s8
  %s11 = scalar_select 0, %s10, %s8
  %12 = sst [smem:[#allocation6]] %s0
  // Predicated region
  $region2: #{gru_encoder_pallas.1} parent=0 // pred_check
    _
  $region3: #{gru_encoder_pallas.1} parent=0 // pred_check_branch
    %14 = sbr.rel (0) target = $region5
  $region4: #{gru_encoder_pallas.1} parent=0 // pred_region
    _
  $region5: #{gru_encoder_pallas.1} parent=0 // pred_fallthru
    _
  // Predicated region
  $region6: #{gru_encoder_pallas.1} parent=0 // pred_check
    _
  $region7: #{gru_encoder_pallas.1} parent=0 // pred_check_branch
    %16 = sbr.rel (0) target = $region9
  $region8: #{gru_encoder_pallas.1} parent=0 // pred_region
    _
  $region9: #{gru_encoder_pallas.1} parent=0 // pred_fallthru
    _
  // Predicated region
  $region10: #{gru_encoder_pallas.1} parent=0 // pred_check
    _
  $region11: #{gru_encoder_pallas.1} parent=0 // pred_check_branch
    %18 = sbr.rel (0) target = $region13
  $region12: #{gru_encoder_pallas.1} parent=0 // pred_region
    _
  $region13: #{gru_encoder_pallas.1} parent=0 // pred_fallthru
    _
  // Predicated region
  $region14: #{gru_encoder_pallas.1} parent=0 // pred_check
    _
  $region15: #{gru_encoder_pallas.1} parent=0 // pred_check_branch
    %20 = sbr.rel (0) target = $region17
  $region16: #{gru_encoder_pallas.1} parent=0 // pred_region
    _
  $region17: #{gru_encoder_pallas.1} parent=0 // pred_fallthru
    _
  // Predicated region
  $region18: #{gru_encoder_pallas.1} parent=0 // pred_check
    _
  $region19: #{gru_encoder_pallas.1} parent=0 // pred_check_branch
    %22 = sbr.rel (0) target = $region21
  $region20: #{gru_encoder_pallas.1} parent=0 // pred_region
    _
  $region21: #{gru_encoder_pallas.1} parent=0 // pred_fallthru
    _
  // Predicated region
  $region22: #{gru_encoder_pallas.1} parent=0 // pred_check
    _
  $region23: #{gru_encoder_pallas.1} parent=0 // pred_check_branch
    %24 = sbr.rel (0) target = $region25
  $region24: #{gru_encoder_pallas.1} parent=0 // pred_region
    _
  $region25: #{gru_encoder_pallas.1} parent=0 // pred_fallthru
    _
  %s25 = smul.u32 0, 8
  %p26 = scmp.eq.s32.totalorder 0, 0
  // Predicated region
  $region26: #{gru_encoder_pallas.1} parent=0 // pred_check
    %p27 = pneg %p26
  $region27: #{gru_encoder_pallas.1} parent=0 // pred_check_branch
    %29 = sbr.rel (%p27) target = $region29
  $region28: #{gru_encoder_pallas.1} parent=0 // pred_region
    %30 = vst [vmem:[#allocation4] sm:$0xff] 0.0
  $region29: #{gru_encoder_pallas.1} parent=0 // pred_fallthru
    _
  %s31 = sld [smem:[#allocation6]]
  %p32 = scmp.gt.s32.totalorder %s31, %s25
  %p33 = scmp.le.s32.totalorder %s31, %s25
  // Predicated region
  $region30: #{gru_encoder_pallas.1} parent=0 // pred_check
    %p34 = pneg %p33
  $region31: #{gru_encoder_pallas.1} parent=0 // pred_check_branch
    %36 = sbr.rel (%p34) target = $region33
  $region32: #{gru_encoder_pallas.1} parent=0 // pred_region
    %vm37 = vcmask 261120
    %38 = vst.msk [vmem:[%s7] sm:$0xff] %vm37, 0.0
    %39 = vst.msk [vmem:[%s7 + $0x8] sm:$0xff] %vm37, 0.0
    %40 = vst.msk [vmem:[%s7 + $0x10] sm:$0xff] %vm37, 0.0
    %41 = vst.msk [vmem:[%s7 + $0x18] sm:$0xff] %vm37, 0.0
    %42 = vst.msk [vmem:[%s7 + $0x20] sm:$0xff] %vm37, 0.0
    %43 = vst.msk [vmem:[%s7 + $0x28] sm:$0xff] %vm37, 0.0
    %44 = vst.msk [vmem:[%s7 + $0x30] sm:$0xff] %vm37, 0.0
    %45 = vst.msk [vmem:[%s7 + $0x38] sm:$0xff] %vm37, 0.0
  $region33: #{gru_encoder_pallas.1} parent=0 // pred_fallthru
    _
  // Predicated region
  $region34: #{gru_encoder_pallas.1} parent=0 // pred_check
    %p46 = pneg %p32
  $region35: #{gru_encoder_pallas.1} parent=0 // pred_check_branch
    %48 = sbr.rel (%p46) target = $region37
  $region36: #{gru_encoder_pallas.1} parent=0 // pred_region
    %v49 = vld [vmem:[%s1] sm:$0xff]
    %v50 = vld [vmem:[%s1 + $0x8] sm:$0xff]
    %v51 = vld [vmem:[%s1 + $0x10] sm:$0xff]
    %v52 = vld [vmem:[%s1 + $0x18] sm:$0xff]
    %v53 = vld [vmem:[%s1 + $0x20] sm:$0xff]
    %v54 = vld [vmem:[%s1 + $0x28] sm:$0xff]
    %v55 = vld [vmem:[%s1 + $0x30] sm:$0xff]
    %v56 = vld [vmem:[%s1 + $0x38] sm:$0xff]
    %v57 = vcombine.low %v49, %v51
    %v58 = vcombine.high %v49, %v51
    %v60 = vunpack.c.l.s4 1983009808
    %v61 = vunpack.c.0.s8 %v60
    %v62 = vlaneseq
    %v63 = vshrl.u32 %v62, 7
    %v64 = vsub.s32 %v61, %v63
    %v65 = vrot.slane %v57, %v64
    %v67 = vunpack.c.l.s4 1983009808
    %v68 = vunpack.c.0.s8 %v67
    %v69 = vlaneseq
    %v70 = vshrl.u32 %v69, 7
    %v71 = vsub.s32 %v68, %v70
    %v72 = vrot.slane %v58, %v71
    %v73 = vcombine.low %v50, %v52
    %v74 = vcombine.high %v50, %v52
    %v76 = vunpack.c.l.s4 1983009808
    %v77 = vunpack.c.0.s8 %v76
    %v78 = vlaneseq
    %v79 = vshrl.u32 %v78, 7
    %v80 = vsub.s32 %v77, %v79
    %v81 = vrot.slane %v73, %v80
    %v83 = vunpack.c.l.s4 1983009808
    %v84 = vunpack.c.0.s8 %v83
    %v85 = vlaneseq
    %v86 = vshrl.u32 %v85, 7
    %v87 = vsub.s32 %v84, %v86
    %v88 = vrot.slane %v74, %v87
    %v89 = vcombine.low %v53, %v55
    %v90 = vcombine.high %v53, %v55
    %v92 = vunpack.c.l.s4 1983009808
    %v93 = vunpack.c.0.s8 %v92
    %v94 = vlaneseq
    %v95 = vshrl.u32 %v94, 7
    %v96 = vsub.s32 %v93, %v95
    %v97 = vrot.slane %v89, %v96
    %v99 = vunpack.c.l.s4 1983009808
    %v100 = vunpack.c.0.s8 %v99
    %v101 = vlaneseq
    %v102 = vshrl.u32 %v101, 7
    %v103 = vsub.s32 %v100, %v102
    %v104 = vrot.slane %v90, %v103
    %v105 = vcombine.low %v54, %v56
    %v106 = vcombine.high %v54, %v56
    %v108 = vunpack.c.l.s4 1983009808
    %v109 = vunpack.c.0.s8 %v108
    %v110 = vlaneseq
    %v111 = vshrl.u32 %v110, 7
    %v112 = vsub.s32 %v109, %v111
    %v113 = vrot.slane %v105, %v112
    %v115 = vunpack.c.l.s4 1983009808
    %v116 = vunpack.c.0.s8 %v115
    %v117 = vlaneseq
    %v118 = vshrl.u32 %v117, 7
    %v119 = vsub.s32 %v116, %v118
    %v120 = vrot.slane %v106, %v119
    %v121 = vcombine.low %v65, %v81
    %v122 = vcombine.high %v65, %v81
    %v124 = vunpack.c.l.s4 1934713408
    %v125 = vunpack.c.0.s8 %v124
    %v126 = vlaneseq
    %v127 = vshrl.u32 %v126, 7
    %v128 = vsub.s32 %v125, %v127
    %v129 = vrot.slane %v121, %v128
    %v131 = vunpack.c.l.s4 1934713408
    %v132 = vunpack.c.0.s8 %v131
    %v133 = vlaneseq
    %v134 = vshrl.u32 %v133, 7
    %v135 = vsub.s32 %v132, %v134
    %v136 = vrot.slane %v122, %v135
    %v137 = vcombine.low %v72, %v88
    %v138 = vcombine.high %v72, %v88
    %v140 = vunpack.c.l.s4 1934713408
    %v141 = vunpack.c.0.s8 %v140
    %v142 = vlaneseq
    %v143 = vshrl.u32 %v142, 7
    %v144 = vsub.s32 %v141, %v143
    %v145 = vrot.slane %v137, %v144
    %v147 = vunpack.c.l.s4 1934713408
    %v148 = vunpack.c.0.s8 %v147
    %v149 = vlaneseq
    %v150 = vshrl.u32 %v149, 7
    %v151 = vsub.s32 %v148, %v150
    %v152 = vrot.slane %v138, %v151
    %v153 = vcombine.low %v97, %v113
    %v154 = vcombine.high %v97, %v113
    %v156 = vunpack.c.l.s4 1934713408
    %v157 = vunpack.c.0.s8 %v156
    %v158 = vlaneseq
    %v159 = vshrl.u32 %v158, 7
    %v160 = vsub.s32 %v157, %v159
    %v161 = vrot.slane %v153, %v160
    %v163 = vunpack.c.l.s4 1934713408
    %v164 = vunpack.c.0.s8 %v163
    %v165 = vlaneseq
    %v166 = vshrl.u32 %v165, 7
    %v167 = vsub.s32 %v164, %v166
    %v168 = vrot.slane %v154, %v167
    %v169 = vcombine.low %v104, %v120
    %v170 = vcombine.high %v104, %v120
    %v172 = vunpack.c.l.s4 1934713408
    %v173 = vunpack.c.0.s8 %v172
    %v174 = vlaneseq
    %v175 = vshrl.u32 %v174, 7
    %v176 = vsub.s32 %v173, %v175
    %v177 = vrot.slane %v169, %v176
    %v179 = vunpack.c.l.s4 1934713408
    %v180 = vunpack.c.0.s8 %v179
    %v181 = vlaneseq
    %v182 = vshrl.u32 %v181, 7
    %v183 = vsub.s32 %v180, %v182
    %v184 = vrot.slane %v170, %v183
    %v185 = vcombine.low %v129, %v161
    %v186 = vcombine.high %v129, %v161
    %v187 = vcombine.low %v136, %v168
    %v188 = vcombine.high %v136, %v168
    %v189 = vcombine.low %v145, %v177
    %v190 = vcombine.high %v145, %v177
    %v191 = vcombine.low %v152, %v184
    %v192 = vcombine.high %v152, %v184
    %v193 = vld [vmem:[%s3] sm:$0xff]
    %v194 = vld [vmem:[%s3 + $0x8] sm:$0xff]
    %v195 = vld [vmem:[%s3 + $0x10] sm:$0xff]
    %v196 = vld [vmem:[%s3 + $0x18] sm:$0xff]
    %v197 = vld [vmem:[%s3 + $0x20] sm:$0xff]
    %v198 = vld [vmem:[%s3 + $0x28] sm:$0xff]
    %v199 = vld [vmem:[%s3 + $0x30] sm:$0xff]
    %v200 = vld [vmem:[%s3 + $0x38] sm:$0xff]
    %v201 = vld [vmem:[%s3 + $0x40] sm:$0xff]
    %v202 = vld [vmem:[%s3 + $0x48] sm:$0xff]
    %v203 = vld [vmem:[%s3 + $0x50] sm:$0xff]
    %v204 = vld [vmem:[%s3 + $0x58] sm:$0xff]
    %v205 = vld [vmem:[%s5] sm:$0x7]
    %v207 = vlaneseq
    %v208 = vshrl.u32 %v207, 7
    %v209 = vsub.s32 0, %v208
    %v210 = vrot.slane %v205, %v209
    %v211 = vlaneseq
    %v212 = vshrl.u32 %v211, 7
    %v213 = vsub.s32 1, %v212
    %v214 = vrot.slane %v205, %v213
    %v215 = vlaneseq
    %v216 = vshrl.u32 %v215, 7
    %v217 = vsub.s32 2, %v216
    %v218 = vrot.slane %v205, %v217
    %vm222 = vcmask 261120
    %v224 = vsel %vm222, %v185, 0
    %v227 = vsel %vm222, %v186, 0
    %v230 = vsel %vm222, %v187, 0
    %v233 = vsel %vm222, %v188, 0
    %v236 = vsel %vm222, %v189, 0
    %v239 = vsel %vm222, %v190, 0
    %v242 = vsel %vm222, %v191, 0
    %v245 = vsel %vm222, %v192, 0
    %247 = vmatprep.subr.mxu0 %v194
    %248 = vmatpush1.msra.mxu0 %v193
    %249 = vmatprep.subr.mxu0 %v197
    %250 = vmatpush1.msra.mxu0 %v196
    %251 = vmatprep.subr.mxu0 %v200
    %252 = vmatpush1.msra.mxu0 %v199
    %253 = vmatprep.subr.mxu0 %v203
    %254 = vmatpush1.msra.mxu0 %v202
    %255 = vmatprep.subr.mxu0 0.0
    %256 = vmatpush1.msra.mxu0 0.0
    %257 = vmatprep.subr.mxu0 0.0
    %258 = vmatpush1.msra.mxu0 0.0
    %259 = vmatprep.subr.mxu0 0.0
    %260 = vmatpush1.msra.mxu0 0.0
    %261 = vmatprep.subr.mxu0 0.0
    %262 = vmatpush1.msra.mxu0 0.0
    %263 = vmatprep.subr.mxu0 0.0
    %264 = vmatpush1.msra.mxu0 0.0
    %265 = vmatprep.subr.mxu0 0.0
    %266 = vmatpush1.msra.mxu0 0.0
    %267 = vmatprep.subr.mxu0 0.0
    %268 = vmatpush1.msra.mxu0 0.0
    %269 = vmatprep.subr.mxu0 0.0
    %270 = vmatpush1.msra.mxu0 0.0
    %271 = vmatprep.subr.mxu0 0.0
    %272 = vmatpush1.msra.mxu0 0.0
    %273 = vmatprep.subr.mxu0 0.0
    %274 = vmatpush1.msra.mxu0 0.0
    %275 = vmatprep.subr.mxu0 0.0
    %276 = vmatpush1.msra.mxu0 0.0
    %277 = vmatprep.subr.mxu0 0.0
    %278 = vmatpush1.msra.mxu0 0.0
    %279 = vmatprep.subr.mxu0 0.0
    %280 = vmatpush1.msra.mxu0 0.0
    %281 = vmatprep.subr.mxu0 0.0
    %282 = vmatpush1.msra.mxu0 0.0
    %283 = vmatprep.subr.mxu0 0.0
    %284 = vmatpush1.msra.mxu0 0.0
    %285 = vmatprep.subr.mxu0 0.0
    %286 = vmatpush1.msra.mxu0 0.0
    %287 = vmatprep.subr.mxu0 0.0
    %288 = vmatpush1.msra.mxu0 0.0
    %289 = vmatprep.subr.mxu0 0.0
    %290 = vmatpush1.msra.mxu0 0.0
    %291 = vmatprep.subr.mxu0 0.0
    %292 = vmatpush1.msra.mxu0 0.0
    %293 = vmatprep.subr.mxu0 0.0
    %294 = vmatpush1.msra.mxu0 0.0
    %295 = vmatprep.subr.mxu0 0.0
    %296 = vmatpush1.msra.mxu0 0.0
    %297 = vmatprep.subr.mxu0 0.0
    %298 = vmatpush1.msra.mxu0 0.0
    %299 = vmatprep.subr.mxu0 0.0
    %300 = vmatpush1.msra.mxu0 0.0
    %301 = vmatprep.subr.mxu0 0.0
    %302 = vmatpush1.msra.mxu0 0.0
    %303 = vmatprep.subr.mxu0 0.0
    %304 = vmatpush1.msra.mxu0 0.0
    %305 = vmatprep.subr.mxu0 0.0
    %306 = vmatpush1.msra.mxu0 0.0
    %307 = vmatprep.subr.mxu0 0.0
    %308 = vmatpush1.msra.mxu0 0.0
    %309 = vmatprep.subr.mxu0 0.0
    %310 = vmatpush1.msra.mxu0 0.0
    %311 = vmatprep.mubr.f32.mxu0 0.0
    %312 = vmatmul.mubr.f32.gmra.mrb[0].mxu0 %v224
    %v313 = vpop.f32.mrb[0].mxu0
    %v314 = vadd.f32 %v210, %v313
    %v315 = vpop.f32.mrb[0].mxu0
    %v316 = vadd.f32 %v214, %v315
    %317 = vmatprep.mubr.f32.mxu0 0.0
    %318 = vmatmul.mubr.f32.gmra.mrb[0].mxu0 %v227
    %v319 = vpop.f32.mrb[0].mxu0
    %v320 = vadd.f32 %v210, %v319
    %v321 = vpop.f32.mrb[0].mxu0
    %v322 = vadd.f32 %v214, %v321
    %323 = vmatprep.mubr.f32.mxu0 0.0
    %324 = vmatmul.mubr.f32.gmra.mrb[0].mxu0 %v230
    %v325 = vpop.f32.mrb[0].mxu0
    %v326 = vadd.f32 %v210, %v325
    %v327 = vpop.f32.mrb[0].mxu0
    %v328 = vadd.f32 %v214, %v327
    %329 = vmatprep.mubr.f32.mxu0 0.0
    %330 = vmatmul.mubr.f32.gmra.mrb[0].mxu0 %v233
    %v331 = vpop.f32.mrb[0].mxu0
    %v332 = vadd.f32 %v210, %v331
    %v333 = vpop.f32.mrb[0].mxu0
    %v334 = vadd.f32 %v214, %v333
    %335 = vmatprep.mubr.f32.mxu0 0.0
    %336 = vmatmul.mubr.f32.gmra.mrb[0].mxu0 %v236
    %v337 = vpop.f32.mrb[0].mxu0
    %v338 = vadd.f32 %v210, %v337
    %v339 = vpop.f32.mrb[0].mxu0
    %v340 = vadd.f32 %v214, %v339
    %341 = vmatprep.mubr.f32.mxu0 0.0
    %342 = vmatmul.mubr.f32.gmra.mrb[0].mxu0 %v239
    %v343 = vpop.f32.mrb[0].mxu0
    %v344 = vadd.f32 %v210, %v343
    %v345 = vpop.f32.mrb[0].mxu0
    %v346 = vadd.f32 %v214, %v345
    %347 = vmatprep.mubr.f32.mxu0 0.0
    %348 = vmatmul.mubr.f32.gmra.mrb[0].mxu0 %v242
    %v349 = vpop.f32.mrb[0].mxu0
    %v350 = vadd.f32 %v210, %v349
    %v351 = vpop.f32.mrb[0].mxu0
    %v352 = vadd.f32 %v214, %v351
    %353 = vmatprep.mubr.f32.mxu0 0.0
    %354 = vmatmul.mubr.f32.gmra.mrb[0].mxu0 %v245
    %v355 = vpop.f32.mrb[0].mxu0
    %v356 = vadd.f32 %v210, %v355
    %v357 = vpop.f32.mrb[0].mxu0
    %v358 = vadd.f32 %v214, %v357
    %359 = vdwg.mxu0
    %360 = vmatprep.subr.mxu0 0.0
    %361 = vmatpush1.msra.mxu0 %v195
    %362 = vmatprep.subr.mxu0 0.0
    %363 = vmatpush1.msra.mxu0 %v198
    %364 = vmatprep.subr.mxu0 0.0
    %365 = vmatpush1.msra.mxu0 %v201
    %366 = vmatprep.subr.mxu0 0.0
    %367 = vmatpush1.msra.mxu0 %v204
    %368 = vmatprep.subr.mxu0 0.0
    %369 = vmatpush1.msra.mxu0 0.0
    %370 = vmatprep.subr.mxu0 0.0
    %371 = vmatpush1.msra.mxu0 0.0
    %372 = vmatprep.subr.mxu0 0.0
    %373 = vmatpush1.msra.mxu0 0.0
    %374 = vmatprep.subr.mxu0 0.0
    %375 = vmatpush1.msra.mxu0 0.0
    %376 = vmatprep.subr.mxu0 0.0
    %377 = vmatpush1.msra.mxu0 0.0
    %378 = vmatprep.subr.mxu0 0.0
    %379 = vmatpush1.msra.mxu0 0.0
    %380 = vmatprep.subr.mxu0 0.0
    %381 = vmatpush1.msra.mxu0 0.0
    %382 = vmatprep.subr.mxu0 0.0
    %383 = vmatpush1.msra.mxu0 0.0
    %384 = vmatprep.subr.mxu0 0.0
    %385 = vmatpush1.msra.mxu0 0.0
    %386 = vmatprep.subr.mxu0 0.0
    %387 = vmatpush1.msra.mxu0 0.0
    %388 = vmatprep.subr.mxu0 0.0
    %389 = vmatpush1.msra.mxu0 0.0
    %390 = vmatprep.subr.mxu0 0.0
    %391 = vmatpush1.msra.mxu0 0.0
    %392 = vmatprep.subr.mxu0 0.0
    %393 = vmatpush1.msra.mxu0 0.0
    %394 = vmatprep.subr.mxu0 0.0
    %395 = vmatpush1.msra.mxu0 0.0
    %396 = vmatprep.subr.mxu0 0.0
    %397 = vmatpush1.msra.mxu0 0.0
    %398 = vmatprep.subr.mxu0 0.0
    %399 = vmatpush1.msra.mxu0 0.0
    %400 = vmatprep.subr.mxu0 0.0
    %401 = vmatpush1.msra.mxu0 0.0
    %402 = vmatprep.subr.mxu0 0.0
    %403 = vmatpush1.msra.mxu0 0.0
    %404 = vmatprep.subr.mxu0 0.0
    %405 = vmatpush1.msra.mxu0 0.0
    %406 = vmatprep.subr.mxu0 0.0
    %407 = vmatpush1.msra.mxu0 0.0
    %408 = vmatprep.subr.mxu0 0.0
    %409 = vmatpush1.msra.mxu0 0.0
    %410 = vmatprep.subr.mxu0 0.0
    %411 = vmatpush1.msra.mxu0 0.0
    %412 = vmatprep.subr.mxu0 0.0
    %413 = vmatpush1.msra.mxu0 0.0
    %414 = vmatprep.subr.mxu0 0.0
    %415 = vmatpush1.msra.mxu0 0.0
    %416 = vmatprep.subr.mxu0 0.0
    %417 = vmatpush1.msra.mxu0 0.0
    %418 = vmatprep.subr.mxu0 0.0
    %419 = vmatpush1.msra.mxu0 0.0
    %420 = vmatprep.subr.mxu0 0.0
    %421 = vmatpush1.msra.mxu0 0.0
    %422 = vmatprep.subr.mxu0 0.0
    %423 = vmatpush1.msra.mxu0 0.0
    %424 = vmatprep.mubr.f32.mxu0 0.0
    %425 = vmatmul.mubr.f32.gmra.mrb[0].mxu0 %v224
    %v426 = vpop.f32.mrb[0].mxu0
    %v427 = vadd.f32 %v218, %v426
    %v428 = vpop.f32.mrb[0].mxu0
    %429 = vmatprep.mubr.f32.mxu0 0.0
    %430 = vmatmul.mubr.f32.gmra.mrb[0].mxu0 %v227
    %v431 = vpop.f32.mrb[0].mxu0
    %v432 = vadd.f32 %v218, %v431
    %v433 = vpop.f32.mrb[0].mxu0
    %434 = vmatprep.mubr.f32.mxu0 0.0
    %435 = vmatmul.mubr.f32.gmra.mrb[0].mxu0 %v230
    %v436 = vpop.f32.mrb[0].mxu0
    %v437 = vadd.f32 %v218, %v436
    %v438 = vpop.f32.mrb[0].mxu0
    %439 = vmatprep.mubr.f32.mxu0 0.0
    %440 = vmatmul.mubr.f32.gmra.mrb[0].mxu0 %v233
    %v441 = vpop.f32.mrb[0].mxu0
    %v442 = vadd.f32 %v218, %v441
    %v443 = vpop.f32.mrb[0].mxu0
    %444 = vmatprep.mubr.f32.mxu0 0.0
    %445 = vmatmul.mubr.f32.gmra.mrb[0].mxu0 %v236
    %v446 = vpop.f32.mrb[0].mxu0
    %v447 = vadd.f32 %v218, %v446
    %v448 = vpop.f32.mrb[0].mxu0
    %449 = vmatprep.mubr.f32.mxu0 0.0
    %450 = vmatmul.mubr.f32.gmra.mrb[0].mxu0 %v239
    %v451 = vpop.f32.mrb[0].mxu0
    %v452 = vadd.f32 %v218, %v451
    %v453 = vpop.f32.mrb[0].mxu0
    %454 = vmatprep.mubr.f32.mxu0 0.0
    %455 = vmatmul.mubr.f32.gmra.mrb[0].mxu0 %v242
    %v456 = vpop.f32.mrb[0].mxu0
    %v457 = vadd.f32 %v218, %v456
    %v458 = vpop.f32.mrb[0].mxu0
    %459 = vmatprep.mubr.f32.mxu0 0.0
    %460 = vmatmul.mubr.f32.gmra.mrb[0].mxu0 %v245
    %v461 = vpop.f32.mrb[0].mxu0
    %v462 = vadd.f32 %v218, %v461
    %v463 = vpop.f32.mrb[0].mxu0
    %464 = vdwg.mxu0
    %465 = vst [vmem:[#allocation2] sm:$0xff] %v314
    %466 = vst [vmem:[#allocation2 + $0x8] sm:$0xff] %v316
    %467 = vst [vmem:[#allocation2 + $0x10] sm:$0xff] %v427
    %468 = vst [vmem:[#allocation2 + $0x18] sm:$0xff] %v320
    %469 = vst [vmem:[#allocation2 + $0x20] sm:$0xff] %v322
    %470 = vst [vmem:[#allocation2 + $0x28] sm:$0xff] %v432
    %471 = vst [vmem:[#allocation2 + $0x30] sm:$0xff] %v326
    %472 = vst [vmem:[#allocation2 + $0x38] sm:$0xff] %v328
    %473 = vst [vmem:[#allocation2 + $0x40] sm:$0xff] %v437
    %474 = vst [vmem:[#allocation2 + $0x48] sm:$0xff] %v332
    %475 = vst [vmem:[#allocation2 + $0x50] sm:$0xff] %v334
    %476 = vst [vmem:[#allocation2 + $0x58] sm:$0xff] %v442
    %477 = vst [vmem:[#allocation2 + $0x60] sm:$0xff] %v338
    %478 = vst [vmem:[#allocation2 + $0x68] sm:$0xff] %v340
    %479 = vst [vmem:[#allocation2 + $0x70] sm:$0xff] %v447
    %480 = vst [vmem:[#allocation2 + $0x78] sm:$0xff] %v344
    %481 = vst [vmem:[#allocation2 + $0x80] sm:$0xff] %v346
    %482 = vst [vmem:[#allocation2 + $0x88] sm:$0xff] %v452
    %483 = vst [vmem:[#allocation2 + $0x90] sm:$0xff] %v350
    %484 = vst [vmem:[#allocation2 + $0x98] sm:$0xff] %v352
    %485 = vst [vmem:[#allocation2 + $0xa0] sm:$0xff] %v457
    %486 = vst [vmem:[#allocation2 + $0xa8] sm:$0xff] %v356
    %487 = vst [vmem:[#allocation2 + $0xb0] sm:$0xff] %v358
    %488 = vst [vmem:[#allocation2 + $0xb8] sm:$0xff] %v462
    %v489 = vld [vmem:[%s4] sm:$0xff]
    %v490 = vld [vmem:[%s4 + $0x8] sm:$0xff]
    %v491 = vld [vmem:[%s4 + $0x10] sm:$0xff]
    %v492 = vld [vmem:[%s4 + $0x18] sm:$0xff]
    %v493 = vld [vmem:[%s4 + $0x20] sm:$0xff]
    %v494 = vld [vmem:[%s4 + $0x28] sm:$0xff]
    %v495 = vld [vmem:[%s4 + $0x30] sm:$0xff]
    %v496 = vld [vmem:[%s4 + $0x38] sm:$0xff]
    %v497 = vld [vmem:[%s4 + $0x40] sm:$0xff]
    %v498 = vld [vmem:[%s4 + $0x48] sm:$0xff]
    %v499 = vld [vmem:[%s4 + $0x50] sm:$0xff]
    %v500 = vld [vmem:[%s4 + $0x58] sm:$0xff]
    %v501 = vld [vmem:[%s4 + $0x60] sm:$0xff]
    %v502 = vld [vmem:[%s4 + $0x68] sm:$0xff]
    %v503 = vld [vmem:[%s4 + $0x70] sm:$0xff]
    %v504 = vld [vmem:[%s4 + $0x78] sm:$0xff]
    %v505 = vld [vmem:[%s4 + $0x80] sm:$0xff]
    %v506 = vld [vmem:[%s4 + $0x88] sm:$0xff]
    %v507 = vld [vmem:[%s4 + $0x90] sm:$0xff]
    %v508 = vld [vmem:[%s4 + $0x98] sm:$0xff]
    %v509 = vld [vmem:[%s4 + $0xa0] sm:$0xff]
    %v510 = vld [vmem:[%s4 + $0xa8] sm:$0xff]
    %v511 = vld [vmem:[%s4 + $0xb0] sm:$0xff]
    %v512 = vld [vmem:[%s4 + $0xb8] sm:$0xff]
    %v513 = vld [vmem:[%s4 + $0xc0] sm:$0xff]
    %v514 = vld [vmem:[%s4 + $0xc8] sm:$0xff]
    %v515 = vld [vmem:[%s4 + $0xd0] sm:$0xff]
    %v516 = vld [vmem:[%s4 + $0xd8] sm:$0xff]
    %v517 = vld [vmem:[%s4 + $0xe0] sm:$0xff]
    %v518 = vld [vmem:[%s4 + $0xe8] sm:$0xff]
    %v519 = vld [vmem:[%s4 + $0xf0] sm:$0xff]
    %v520 = vld [vmem:[%s4 + $0xf8] sm:$0xff]
    %v521 = vld [vmem:[%s4 + $0x100] sm:$0xff]
    %v522 = vld [vmem:[%s4 + $0x108] sm:$0xff]
    %v523 = vld [vmem:[%s4 + $0x110] sm:$0xff]
    %v524 = vld [vmem:[%s4 + $0x118] sm:$0xff]
    %v525 = vld [vmem:[%s4 + $0x120] sm:$0xff]
    %v526 = vld [vmem:[%s4 + $0x128] sm:$0xff]
    %v527 = vld [vmem:[%s4 + $0x130] sm:$0xff]
    %v528 = vld [vmem:[%s4 + $0x138] sm:$0xff]
    %v529 = vld [vmem:[%s4 + $0x140] sm:$0xff]
    %v530 = vld [vmem:[%s4 + $0x148] sm:$0xff]
    %v531 = vld [vmem:[%s4 + $0x150] sm:$0xff]
    %v532 = vld [vmem:[%s4 + $0x158] sm:$0xff]
    %v533 = vld [vmem:[%s4 + $0x160] sm:$0xff]
    %v534 = vld [vmem:[%s4 + $0x168] sm:$0xff]
    %v535 = vld [vmem:[%s4 + $0x170] sm:$0xff]
    %v536 = vld [vmem:[%s4 + $0x178] sm:$0xff]
    %v537 = vld [vmem:[%s6] sm:$0x7]
    %v538 = vld [vmem:[%s2] sm:$0xff]
    %v539 = vld [vmem:[#allocation4] sm:$0xff]
    %v540 = vld [vmem:[#allocation2] sm:$0xff]
    %v541 = vld [vmem:[#allocation2 + $0x8] sm:$0xff]
    %v542 = vld [vmem:[#allocation2 + $0x10] sm:$0xff]
    %v544 = vlaneseq
    %v545 = vshrl.u32 %v544, 7
    %v546 = vsub.s32 0, %v545
    %v547 = vrot.slane %v537, %v546
    %v548 = vlaneseq
    %v549 = vshrl.u32 %v548, 7
    %v550 = vsub.s32 1, %v549
    %v551 = vrot.slane %v537, %v550
    %v552 = vlaneseq
    %v553 = vshrl.u32 %v552, 7
    %v554 = vsub.s32 2, %v553
    %v555 = vrot.slane %v537, %v554
    %559 = vmatprep.subr.mxu0 %v490
    %560 = vmatpush1.msra.mxu0 %v489
    %561 = vmatprep.subr.mxu0 %v493
    %562 = vmatpush1.msra.mxu0 %v492
    %563 = vmatprep.subr.mxu0 %v496
    %564 = vmatpush1.msra.mxu0 %v495
    %565 = vmatprep.subr.mxu0 %v499
    %566 = vmatpush1.msra.mxu0 %v498
    %567 = vmatprep.subr.mxu0 %v502
    %568 = vmatpush1.msra.mxu0 %v501
    %569 = vmatprep.subr.mxu0 %v505
    %570 = vmatpush1.msra.mxu0 %v504
    %571 = vmatprep.subr.mxu0 %v508
    %572 = vmatpush1.msra.mxu0 %v507
    %573 = vmatprep.subr.mxu0 %v511
    %574 = vmatpush1.msra.mxu0 %v510
    %575 = vmatprep.subr.mxu0 %v514
    %576 = vmatpush1.msra.mxu0 %v513
    %577 = vmatprep.subr.mxu0 %v517
    %578 = vmatpush1.msra.mxu0 %v516
    %579 = vmatprep.subr.mxu0 %v520
    %580 = vmatpush1.msra.mxu0 %v519
    %581 = vmatprep.subr.mxu0 %v523
    %582 = vmatpush1.msra.mxu0 %v522
    %583 = vmatprep.subr.mxu0 %v526
    %584 = vmatpush1.msra.mxu0 %v525
    %585 = vmatprep.subr.mxu0 %v529
    %586 = vmatpush1.msra.mxu0 %v528
    %587 = vmatprep.subr.mxu0 %v532
    %588 = vmatpush1.msra.mxu0 %v531
    %589 = vmatprep.subr.mxu0 %v535
    %590 = vmatpush1.msra.mxu0 %v534
    %591 = vmatprep.subr.mxu0 0.0
    %592 = vmatpush1.msra.mxu0 0.0
    %593 = vmatprep.subr.mxu0 0.0
    %594 = vmatpush1.msra.mxu0 0.0
    %595 = vmatprep.subr.mxu0 0.0
    %596 = vmatpush1.msra.mxu0 0.0
    %597 = vmatprep.subr.mxu0 0.0
    %598 = vmatpush1.msra.mxu0 0.0
    %599 = vmatprep.subr.mxu0 0.0
    %600 = vmatpush1.msra.mxu0 0.0
    %601 = vmatprep.subr.mxu0 0.0
    %602 = vmatpush1.msra.mxu0 0.0
    %603 = vmatprep.subr.mxu0 0.0
    %604 = vmatpush1.msra.mxu0 0.0
    %605 = vmatprep.subr.mxu0 0.0
    %606 = vmatpush1.msra.mxu0 0.0
    %607 = vmatprep.subr.mxu0 0.0
    %608 = vmatpush1.msra.mxu0 0.0
    %609 = vmatprep.subr.mxu0 0.0
    %610 = vmatpush1.msra.mxu0 0.0
    %611 = vmatprep.subr.mxu0 0.0
    %612 = vmatpush1.msra.mxu0 0.0
    %613 = vmatprep.subr.mxu0 0.0
    %614 = vmatpush1.msra.mxu0 0.0
    %615 = vmatprep.subr.mxu0 0.0
    %616 = vmatpush1.msra.mxu0 0.0
    %617 = vmatprep.subr.mxu0 0.0
    %618 = vmatpush1.msra.mxu0 0.0
    %619 = vmatprep.subr.mxu0 0.0
    %620 = vmatpush1.msra.mxu0 0.0
    %621 = vmatprep.subr.mxu0 0.0
    %622 = vmatpush1.msra.mxu0 0.0
    %623 = vmatprep.mubr.f32.mxu0 0.0
    %624 = vmatmul.mubr.f32.gmra.mrb[0].mxu0 %v539
    %v625 = vpop.f32.mrb[0].mxu0
    %v626 = vadd.f32 %v547, %v625
    %v627 = vpop.f32.mrb[0].mxu0
    %v628 = vadd.f32 %v551, %v627
    %629 = vdwg.mxu0
    %630 = vmatprep.subr.mxu0 0.0
    %631 = vmatpush1.msra.mxu0 %v491
    %632 = vmatprep.subr.mxu0 0.0
    %633 = vmatpush1.msra.mxu0 %v494
    %634 = vmatprep.subr.mxu0 0.0
    %635 = vmatpush1.msra.mxu0 %v497
    %636 = vmatprep.subr.mxu0 0.0
    %637 = vmatpush1.msra.mxu0 %v500
    %638 = vmatprep.subr.mxu0 0.0
    %639 = vmatpush1.msra.mxu0 %v503
    %640 = vmatprep.subr.mxu0 0.0
    %641 = vmatpush1.msra.mxu0 %v506
    %642 = vmatprep.subr.mxu0 0.0
    %643 = vmatpush1.msra.mxu0 %v509
    %644 = vmatprep.subr.mxu0 0.0
    %645 = vmatpush1.msra.mxu0 %v512
    %646 = vmatprep.subr.mxu0 0.0
    %647 = vmatpush1.msra.mxu0 %v515
    %648 = vmatprep.subr.mxu0 0.0
    %649 = vmatpush1.msra.mxu0 %v518
    %650 = vmatprep.subr.mxu0 0.0
    %651 = vmatpush1.msra.mxu0 %v521
    %652 = vmatprep.subr.mxu0 0.0
    %653 = vmatpush1.msra.mxu0 %v524
    %654 = vmatprep.subr.mxu0 0.0
    %655 = vmatpush1.msra.mxu0 %v527
    %656 = vmatprep.subr.mxu0 0.0
    %657 = vmatpush1.msra.mxu0 %v530
    %658 = vmatprep.subr.mxu0 0.0
    %659 = vmatpush1.msra.mxu0 %v533
    %660 = vmatprep.subr.mxu0 0.0
    %661 = vmatpush1.msra.mxu0 %v536
    %662 = vmatprep.subr.mxu0 0.0
    %663 = vmatpush1.msra.mxu0 0.0
    %664 = vmatprep.subr.mxu0 0.0
    %665 = vmatpush1.msra.mxu0 0.0
    %666 = vmatprep.subr.mxu0 0.0
    %667 = vmatpush1.msra.mxu0 0.0
    %668 = vmatprep.subr.mxu0 0.0
    %669 = vmatpush1.msra.mxu0 0.0
    %670 = vmatprep.subr.mxu0 0.0
    %671 = vmatpush1.msra.mxu0 0.0
    %672 = vmatprep.subr.mxu0 0.0
    %673 = vmatpush1.msra.mxu0 0.0
    %674 = vmatprep.subr.mxu0 0.0
    %675 = vmatpush1.msra.mxu0 0.0
    %676 = vmatprep.subr.mxu0 0.0
    %677 = vmatpush1.msra.mxu0 0.0
    %678 = vmatprep.subr.mxu0 0.0
    %679 = vmatpush1.msra.mxu0 0.0
    %680 = vmatprep.subr.mxu0 0.0
    %681 = vmatpush1.msra.mxu0 0.0
    %682 = vmatprep.subr.mxu0 0.0
    %683 = vmatpush1.msra.mxu0 0.0
    %684 = vmatprep.subr.mxu0 0.0
    %685 = vmatpush1.msra.mxu0 0.0
    %686 = vmatprep.subr.mxu0 0.0
    %687 = vmatpush1.msra.mxu0 0.0
    %688 = vmatprep.subr.mxu0 0.0
    %689 = vmatpush1.msra.mxu0 0.0
    %690 = vmatprep.subr.mxu0 0.0
    %691 = vmatpush1.msra.mxu0 0.0
    %692 = vmatprep.subr.mxu0 0.0
    %693 = vmatpush1.msra.mxu0 0.0
    %694 = vmatprep.mubr.f32.mxu0 0.0
    %695 = vmatmul.mubr.f32.gmra.mrb[0].mxu0 %v539
    %v696 = vpop.f32.mrb[0].mxu0
    %v697 = vadd.f32 %v555, %v696
    %v698 = vpop.f32.mrb[0].mxu0
    %699 = vdwg.mxu0
    %v700 = vadd.f32 %v540, %v626
    %v701 = vxor.u32 %v700, 2147483648
    %v702 = vmul.f32 %v701, 1.442695
    %v703 = vpow.pop %v702
    %v704 = vadd.f32 %v703, 1.0
    %v705 = vrcp.pop %v704
    %v706 = vmul.f32 1.0, %v705
    %v707 = vadd.f32 %v541, %v628
    %v708 = vxor.u32 %v707, 2147483648
    %v709 = vmul.f32 %v708, 1.442695
    %v710 = vpow.pop %v709
    %v711 = vadd.f32 %v710, 1.0
    %v712 = vrcp.pop %v711
    %v713 = vmul.f32 1.0, %v712
    %v714 = vmul.f32 %v706, %v697
    %v715 = vadd.f32 %v542, %v714
    %v716 = vtanh.pop %v715
    %v717 = vsub.f32 1.0, %v713
    %v718 = vmul.f32 %v717, %v716
    %v719 = vmul.f32 %v713, %v539
    %v720 = vadd.f32 %v718, %v719
    %v721 = vstv %s25
    %vm722 = vcmp.gt.s32.totalorder %v538, %v721
    %v723 = vsel %vm722, 1, 0
    %724 = vset.pattern.permute.xlu0 0
    %725 = vperm.xlu0 %724, %v723
    %v726 = vpop.permute.xlu0 %725
    %vm727 = vcmp.eq.s32.totalorder %v726, 1
    %v728 = vsel %vm727, %v720, 0.0
    %729 = vst [vmem:[#allocation3] sm:$0xff] %v728
    %v730 = vsel %vm727, %v720, %v539
    %s731 = scalar_lea.vmem [#allocation2], 24
    %v732 = vld [vmem:[%s731] sm:$0xff]
    %v733 = vld [vmem:[%s731 + $0x8] sm:$0xff]
    %v734 = vld [vmem:[%s731 + $0x10] sm:$0xff]
    %735 = vmatprep.subr.mxu0 %v490
    %736 = vmatpush1.msra.mxu0 %v489
    %737 = vmatprep.subr.mxu0 %v493
    %738 = vmatpush1.msra.mxu0 %v492
    %739 = vmatprep.subr.mxu0 %v496
    %740 = vmatpush1.msra.mxu0 %v495
    %741 = vmatprep.subr.mxu0 %v499
    %742 = vmatpush1.msra.mxu0 %v498
    %743 = vmatprep.subr.mxu0 %v502
    %744 = vmatpush1.msra.mxu0 %v501
    %745 = vmatprep.subr.mxu0 %v505
    %746 = vmatpush1.msra.mxu0 %v504
    %747 = vmatprep.subr.mxu0 %v508
    %748 = vmatpush1.msra.mxu0 %v507
    %749 = vmatprep.subr.mxu0 %v511
    %750 = vmatpush1.msra.mxu0 %v510
    %751 = vmatprep.subr.mxu0 %v514
    %752 = vmatpush1.msra.mxu0 %v513
    %753 = vmatprep.subr.mxu0 %v517
    %754 = vmatpush1.msra.mxu0 %v516
    %755 = vmatprep.subr.mxu0 %v520
    %756 = vmatpush1.msra.mxu0 %v519
    %757 = vmatprep.subr.mxu0 %v523
    %758 = vmatpush1.msra.mxu0 %v522
    %759 = vmatprep.subr.mxu0 %v526
    %760 = vmatpush1.msra.mxu0 %v525
    %761 = vmatprep.subr.mxu0 %v529
    %762 = vmatpush1.msra.mxu0 %v528
    %763 = vmatprep.subr.mxu0 %v532
    %764 = vmatpush1.msra.mxu0 %v531
    %765 = vmatprep.subr.mxu0 %v535
    %766 = vmatpush1.msra.mxu0 %v534
    %767 = vmatprep.subr.mxu0 0.0
    %768 = vmatpush1.msra.mxu0 0.0
    %769 = vmatprep.subr.mxu0 0.0
    %770 = vmatpush1.msra.mxu0 0.0
    %771 = vmatprep.subr.mxu0 0.0
    %772 = vmatpush1.msra.mxu0 0.0
    %773 = vmatprep.subr.mxu0 0.0
    %774 = vmatpush1.msra.mxu0 0.0
    %775 = vmatprep.subr.mxu0 0.0
    %776 = vmatpush1.msra.mxu0 0.0
    %777 = vmatprep.subr.mxu0 0.0
    %778 = vmatpush1.msra.mxu0 0.0
    %779 = vmatprep.subr.mxu0 0.0
    %780 = vmatpush1.msra.mxu0 0.0
    %781 = vmatprep.subr.mxu0 0.0
    %782 = vmatpush1.msra.mxu0 0.0
    %783 = vmatprep.subr.mxu0 0.0
    %784 = vmatpush1.msra.mxu0 0.0
    %785 = vmatprep.subr.mxu0 0.0
    %786 = vmatpush1.msra.mxu0 0.0
    %787 = vmatprep.subr.mxu0 0.0
    %788 = vmatpush1.msra.mxu0 0.0
    %789 = vmatprep.subr.mxu0 0.0
    %790 = vmatpush1.msra.mxu0 0.0
    %791 = vmatprep.subr.mxu0 0.0
    %792 = vmatpush1.msra.mxu0 0.0
    %793 = vmatprep.subr.mxu0 0.0
    %794 = vmatpush1.msra.mxu0 0.0
    %795 = vmatprep.subr.mxu0 0.0
    %796 = vmatpush1.msra.mxu0 0.0
    %797 = vmatprep.subr.mxu0 0.0
    %798 = vmatpush1.msra.mxu0 0.0
    %799 = vmatprep.mubr.f32.mxu0 0.0
    %800 = vmatmul.mubr.f32.gmra.mrb[0].mxu0 %v730
    %v801 = vpop.f32.mrb[0].mxu0
    %v802 = vadd.f32 %v547, %v801
    %v803 = vpop.f32.mrb[0].mxu0
    %v804 = vadd.f32 %v551, %v803
    %805 = vdwg.mxu0
    %806 = vmatprep.subr.mxu0 0.0
    %807 = vmatpush1.msra.mxu0 %v491
    %808 = vmatprep.subr.mxu0 0.0
    %809 = vmatpush1.msra.mxu0 %v494
    %810 = vmatprep.subr.mxu0 0.0
    %811 = vmatpush1.msra.mxu0 %v497
    %812 = vmatprep.subr.mxu0 0.0
    %813 = vmatpush1.msra.mxu0 %v500
    %814 = vmatprep.subr.mxu0 0.0
    %815 = vmatpush1.msra.mxu0 %v503
    %816 = vmatprep.subr.mxu0 0.0
    %817 = vmatpush1.msra.mxu0 %v506
    %818 = vmatprep.subr.mxu0 0.0
    %819 = vmatpush1.msra.mxu0 %v509
    %820 = vmatprep.subr.mxu0 0.0
    %821 = vmatpush1.msra.mxu0 %v512
    %822 = vmatprep.subr.mxu0 0.0
    %823 = vmatpush1.msra.mxu0 %v515
    %824 = vmatprep.subr.mxu0 0.0
    %825 = vmatpush1.msra.mxu0 %v518
    %826 = vmatprep.subr.mxu0 0.0
    %827 = vmatpush1.msra.mxu0 %v521
    %828 = vmatprep.subr.mxu0 0.0
    %829 = vmatpush1.msra.mxu0 %v524
    %830 = vmatprep.subr.mxu0 0.0
    %831 = vmatpush1.msra.mxu0 %v527
    %832 = vmatprep.subr.mxu0 0.0
    %833 = vmatpush1.msra.mxu0 %v530
    %834 = vmatprep.subr.mxu0 0.0
    %835 = vmatpush1.msra.mxu0 %v533
    %836 = vmatprep.subr.mxu0 0.0
    %837 = vmatpush1.msra.mxu0 %v536
    %838 = vmatprep.subr.mxu0 0.0
    %839 = vmatpush1.msra.mxu0 0.0
    %840 = vmatprep.subr.mxu0 0.0
    %841 = vmatpush1.msra.mxu0 0.0
    %842 = vmatprep.subr.mxu0 0.0
    %843 = vmatpush1.msra.mxu0 0.0
    %844 = vmatprep.subr.mxu0 0.0
    %845 = vmatpush1.msra.mxu0 0.0
    %846 = vmatprep.subr.mxu0 0.0
    %847 = vmatpush1.msra.mxu0 0.0
    %848 = vmatprep.subr.mxu0 0.0
    %849 = vmatpush1.msra.mxu0 0.0
    %850 = vmatprep.subr.mxu0 0.0
    %851 = vmatpush1.msra.mxu0 0.0
    %852 = vmatprep.subr.mxu0 0.0
    %853 = vmatpush1.msra.mxu0 0.0
    %854 = vmatprep.subr.mxu0 0.0
    %855 = vmatpush1.msra.mxu0 0.0
    %856 = vmatprep.subr.mxu0 0.0
    %857 = vmatpush1.msra.mxu0 0.0
    %858 = vmatprep.subr.mxu0 0.0
    %859 = vmatpush1.msra.mxu0 0.0
    %860 = vmatprep.subr.mxu0 0.0
    %861 = vmatpush1.msra.mxu0 0.0
    %862 = vmatprep.subr.mxu0 0.0
    %863 = vmatpush1.msra.mxu0 0.0
    %864 = vmatprep.subr.mxu0 0.0
    %865 = vmatpush1.msra.mxu0 0.0
    %866 = vmatprep.subr.mxu0 0.0
    %867 = vmatpush1.msra.mxu0 0.0
    %868 = vmatprep.subr.mxu0 0.0
    %869 = vmatpush1.msra.mxu0 0.0
    %870 = vmatprep.mubr.f32.mxu0 0.0
    %871 = vmatmul.mubr.f32.gmra.mrb[0].mxu0 %v730
    %v872 = vpop.f32.mrb[0].mxu0
    %v873 = vadd.f32 %v555, %v872
    %v874 = vpop.f32.mrb[0].mxu0
    %875 = vdwg.mxu0
    %v876 = vadd.f32 %v732, %v802
    %v877 = vxor.u32 %v876, 2147483648
    %v878 = vmul.f32 %v877, 1.442695
    %v879 = vpow.pop %v878
    %v880 = vadd.f32 %v879, 1.0
    %v881 = vrcp.pop %v880
    %v882 = vmul.f32 1.0, %v881
    %v883 = vadd.f32 %v733, %v804
    %v884 = vxor.u32 %v883, 2147483648
    %v885 = vmul.f32 %v884, 1.442695
    %v886 = vpow.pop %v885
    %v887 = vadd.f32 %v886, 1.0
    %v888 = vrcp.pop %v887
    %v889 = vmul.f32 1.0, %v888
    %v890 = vmul.f32 %v882, %v873
    %v891 = vadd.f32 %v734, %v890
    %v892 = vtanh.pop %v891
    %v893 = vsub.f32 1.0, %v889
    %v894 = vmul.f32 %v893, %v892
    %v895 = vmul.f32 %v889, %v730
    %v896 = vadd.f32 %v894, %v895
    %s897 = sadd.s32 %s25, 1
    %v898 = vstv %s897
    %vm899 = vcmp.gt.s32.totalorder %v538, %v898
    %v900 = vsel %vm899, 1, 0
    %901 = vset.pattern.permute.xlu0 0
    %902 = vperm.xlu0 %901, %v900
    %v903 = vpop.permute.xlu0 %902
    %vm904 = vcmp.eq.s32.totalorder %v903, 1
    %v905 = vsel %vm904, %v896, 0.0
    %s906 = scalar_lea.vmem [#allocation3], 8
    %907 = vst [vmem:[%s906] sm:$0xff] %v905
    %v908 = vsel %vm904, %v896, %v730
    %s909 = scalar_lea.vmem [#allocation2], 48
    %v910 = vld [vmem:[%s909] sm:$0xff]
    %v911 = vld [vmem:[%s909 + $0x8] sm:$0xff]
    %v912 = vld [vmem:[%s909 + $0x10] sm:$0xff]
    %913 = vmatprep.subr.mxu0 %v490
    %914 = vmatpush1.msra.mxu0 %v489
    %915 = vmatprep.subr.mxu0 %v493
    %916 = vmatpush1.msra.mxu0 %v492
    %917 = vmatprep.subr.mxu0 %v496
    %918 = vmatpush1.msra.mxu0 %v495
    %919 = vmatprep.subr.mxu0 %v499
    %920 = vmatpush1.msra.mxu0 %v498
    %921 = vmatprep.subr.mxu0 %v502
    %922 = vmatpush1.msra.mxu0 %v501
    %923 = vmatprep.subr.mxu0 %v505
    %924 = vmatpush1.msra.mxu0 %v504
    %925 = vmatprep.subr.mxu0 %v508
    %926 = vmatpush1.msra.mxu0 %v507
    %927 = vmatprep.subr.mxu0 %v511
    %928 = vmatpush1.msra.mxu0 %v510
    %929 = vmatprep.subr.mxu0 %v514
    %930 = vmatpush1.msra.mxu0 %v513
    %931 = vmatprep.subr.mxu0 %v517
    %932 = vmatpush1.msra.mxu0 %v516
    %933 = vmatprep.subr.mxu0 %v520
    %934 = vmatpush1.msra.mxu0 %v519
    %935 = vmatprep.subr.mxu0 %v523
    %936 = vmatpush1.msra.mxu0 %v522
    %937 = vmatprep.subr.mxu0 %v526
    %938 = vmatpush1.msra.mxu0 %v525
    %939 = vmatprep.subr.mxu0 %v529
    %940 = vmatpush1.msra.mxu0 %v528
    %941 = vmatprep.subr.mxu0 %v532
    %942 = vmatpush1.msra.mxu0 %v531
    %943 = vmatprep.subr.mxu0 %v535
    %944 = vmatpush1.msra.mxu0 %v534
    %945 = vmatprep.subr.mxu0 0.0
    %946 = vmatpush1.msra.mxu0 0.0
    %947 = vmatprep.subr.mxu0 0.0
    %948 = vmatpush1.msra.mxu0 0.0
    %949 = vmatprep.subr.mxu0 0.0
    %950 = vmatpush1.msra.mxu0 0.0
    %951 = vmatprep.subr.mxu0 0.0
    %952 = vmatpush1.msra.mxu0 0.0
    %953 = vmatprep.subr.mxu0 0.0
    %954 = vmatpush1.msra.mxu0 0.0
    %955 = vmatprep.subr.mxu0 0.0
    %956 = vmatpush1.msra.mxu0 0.0
    %957 = vmatprep.subr.mxu0 0.0
    %958 = vmatpush1.msra.mxu0 0.0
    %959 = vmatprep.subr.mxu0 0.0
    %960 = vmatpush1.msra.mxu0 0.0
    %961 = vmatprep.subr.mxu0 0.0
    %962 = vmatpush1.msra.mxu0 0.0
    %963 = vmatprep.subr.mxu0 0.0
    %964 = vmatpush1.msra.mxu0 0.0
    %965 = vmatprep.subr.mxu0 0.0
    %966 = vmatpush1.msra.mxu0 0.0
    %967 = vmatprep.subr.mxu0 0.0
    %968 = vmatpush1.msra.mxu0 0.0
    %969 = vmatprep.subr.mxu0 0.0
    %970 = vmatpush1.msra.mxu0 0.0
    %971 = vmatprep.subr.mxu0 0.0
    %972 = vmatpush1.msra.mxu0 0.0
    %973 = vmatprep.subr.mxu0 0.0
    %974 = vmatpush1.msra.mxu0 0.0
    %975 = vmatprep.subr.mxu0 0.0
    %976 = vmatpush1.msra.mxu0 0.0
    %977 = vmatprep.mubr.f32.mxu0 0.0
    %978 = vmatmul.mubr.f32.gmra.mrb[0].mxu0 %v908
    %v979 = vpop.f32.mrb[0].mxu0
    %v980 = vadd.f32 %v547, %v979
    %v981 = vpop.f32.mrb[0].mxu0
    %v982 = vadd.f32 %v551, %v981
    %983 = vdwg.mxu0
    %984 = vmatprep.subr.mxu0 0.0
    %985 = vmatpush1.msra.mxu0 %v491
    %986 = vmatprep.subr.mxu0 0.0
    %987 = vmatpush1.msra.mxu0 %v494
    %988 = vmatprep.subr.mxu0 0.0
    %989 = vmatpush1.msra.mxu0 %v497
    %990 = vmatprep.subr.mxu0 0.0
    %991 = vmatpush1.msra.mxu0 %v500
    %992 = vmatprep.subr.mxu0 0.0
    %993 = vmatpush1.msra.mxu0 %v503
    %994 = vmatprep.subr.mxu0 0.0
    %995 = vmatpush1.msra.mxu0 %v506
    %996 = vmatprep.subr.mxu0 0.0
    %997 = vmatpush1.msra.mxu0 %v509
    %998 = vmatprep.subr.mxu0 0.0
    %999 = vmatpush1.msra.mxu0 %v512
    %1000 = vmatprep.subr.mxu0 0.0
    %1001 = vmatpush1.msra.mxu0 %v515
    %1002 = vmatprep.subr.mxu0 0.0
    %1003 = vmatpush1.msra.mxu0 %v518
    %1004 = vmatprep.subr.mxu0 0.0
    %1005 = vmatpush1.msra.mxu0 %v521
    %1006 = vmatprep.subr.mxu0 0.0
    %1007 = vmatpush1.msra.mxu0 %v524
    %1008 = vmatprep.subr.mxu0 0.0
    %1009 = vmatpush1.msra.mxu0 %v527
    %1010 = vmatprep.subr.mxu0 0.0
    %1011 = vmatpush1.msra.mxu0 %v530
    %1012 = vmatprep.subr.mxu0 0.0
    %1013 = vmatpush1.msra.mxu0 %v533
    %1014 = vmatprep.subr.mxu0 0.0
    %1015 = vmatpush1.msra.mxu0 %v536
    %1016 = vmatprep.subr.mxu0 0.0
    %1017 = vmatpush1.msra.mxu0 0.0
    %1018 = vmatprep.subr.mxu0 0.0
    %1019 = vmatpush1.msra.mxu0 0.0
    %1020 = vmatprep.subr.mxu0 0.0
    %1021 = vmatpush1.msra.mxu0 0.0
    %1022 = vmatprep.subr.mxu0 0.0
    %1023 = vmatpush1.msra.mxu0 0.0
    %1024 = vmatprep.subr.mxu0 0.0
    %1025 = vmatpush1.msra.mxu0 0.0
    %1026 = vmatprep.subr.mxu0 0.0
    %1027 = vmatpush1.msra.mxu0 0.0
    %1028 = vmatprep.subr.mxu0 0.0
    %1029 = vmatpush1.msra.mxu0 0.0
    %1030 = vmatprep.subr.mxu0 0.0
    %1031 = vmatpush1.msra.mxu0 0.0
    %1032 = vmatprep.subr.mxu0 0.0
    %1033 = vmatpush1.msra.mxu0 0.0
    %1034 = vmatprep.subr.mxu0 0.0
    %1035 = vmatpush1.msra.mxu0 0.0
    %1036 = vmatprep.subr.mxu0 0.0
    %1037 = vmatpush1.msra.mxu0 0.0
    %1038 = vmatprep.subr.mxu0 0.0
    %1039 = vmatpush1.msra.mxu0 0.0
    %1040 = vmatprep.subr.mxu0 0.0
    %1041 = vmatpush1.msra.mxu0 0.0
    %1042 = vmatprep.subr.mxu0 0.0
    %1043 = vmatpush1.msra.mxu0 0.0
    %1044 = vmatprep.subr.mxu0 0.0
    %1045 = vmatpush1.msra.mxu0 0.0
    %1046 = vmatprep.subr.mxu0 0.0
    %1047 = vmatpush1.msra.mxu0 0.0
    %1048 = vmatprep.mubr.f32.mxu0 0.0
    %1049 = vmatmul.mubr.f32.gmra.mrb[0].mxu0 %v908
    %v1050 = vpop.f32.mrb[0].mxu0
    %v1051 = vadd.f32 %v555, %v1050
    %v1052 = vpop.f32.mrb[0].mxu0
    %1053 = vdwg.mxu0
    %v1054 = vadd.f32 %v910, %v980
    %v1055 = vxor.u32 %v1054, 2147483648
    %v1056 = vmul.f32 %v1055, 1.442695
    %v1057 = vpow.pop %v1056
    %v1058 = vadd.f32 %v1057, 1.0
    %v1059 = vrcp.pop %v1058
    %v1060 = vmul.f32 1.0, %v1059
    %v1061 = vadd.f32 %v911, %v982
    %v1062 = vxor.u32 %v1061, 2147483648
    %v1063 = vmul.f32 %v1062, 1.442695
    %v1064 = vpow.pop %v1063
    %v1065 = vadd.f32 %v1064, 1.0
    %v1066 = vrcp.pop %v1065
    %v1067 = vmul.f32 1.0, %v1066
    %v1068 = vmul.f32 %v1060, %v1051
    %v1069 = vadd.f32 %v912, %v1068
    %v1070 = vtanh.pop %v1069
    %v1071 = vsub.f32 1.0, %v1067
    %v1072 = vmul.f32 %v1071, %v1070
    %v1073 = vmul.f32 %v1067, %v908
    %v1074 = vadd.f32 %v1072, %v1073
    %s1075 = sadd.s32 %s25, 2
    %v1076 = vstv %s1075
    %vm1077 = vcmp.gt.s32.totalorder %v538, %v1076
    %v1078 = vsel %vm1077, 1, 0
    %1079 = vset.pattern.permute.xlu0 0
    %1080 = vperm.xlu0 %1079, %v1078
    %v1081 = vpop.permute.xlu0 %1080
    %vm1082 = vcmp.eq.s32.totalorder %v1081, 1
    %v1083 = vsel %vm1082, %v1074, 0.0
    %s1084 = scalar_lea.vmem [#allocation3], 16
    %1085 = vst [vmem:[%s1084] sm:$0xff] %v1083
    %v1086 = vsel %vm1082, %v1074, %v908
    %s1087 = scalar_lea.vmem [#allocation2], 72
    %v1088 = vld [vmem:[%s1087] sm:$0xff]
    %v1089 = vld [vmem:[%s1087 + $0x8] sm:$0xff]
    %v1090 = vld [vmem:[%s1087 + $0x10] sm:$0xff]
    %1091 = vmatprep.subr.mxu0 %v490
    %1092 = vmatpush1.msra.mxu0 %v489
    %1093 = vmatprep.subr.mxu0 %v493
    %1094 = vmatpush1.msra.mxu0 %v492
    %1095 = vmatprep.subr.mxu0 %v496
    %1096 = vmatpush1.msra.mxu0 %v495
    %1097 = vmatprep.subr.mxu0 %v499
    %1098 = vmatpush1.msra.mxu0 %v498
    %1099 = vmatprep.subr.mxu0 %v502
    %1100 = vmatpush1.msra.mxu0 %v501
    %1101 = vmatprep.subr.mxu0 %v505
    %1102 = vmatpush1.msra.mxu0 %v504
    %1103 = vmatprep.subr.mxu0 %v508
    %1104 = vmatpush1.msra.mxu0 %v507
    %1105 = vmatprep.subr.mxu0 %v511
    %1106 = vmatpush1.msra.mxu0 %v510
    %1107 = vmatprep.subr.mxu0 %v514
    %1108 = vmatpush1.msra.mxu0 %v513
    %1109 = vmatprep.subr.mxu0 %v517
    %1110 = vmatpush1.msra.mxu0 %v516
    %1111 = vmatprep.subr.mxu0 %v520
    %1112 = vmatpush1.msra.mxu0 %v519
    %1113 = vmatprep.subr.mxu0 %v523
    %1114 = vmatpush1.msra.mxu0 %v522
    %1115 = vmatprep.subr.mxu0 %v526
    %1116 = vmatpush1.msra.mxu0 %v525
    %1117 = vmatprep.subr.mxu0 %v529
    %1118 = vmatpush1.msra.mxu0 %v528
    %1119 = vmatprep.subr.mxu0 %v532
    %1120 = vmatpush1.msra.mxu0 %v531
    %1121 = vmatprep.subr.mxu0 %v535
    %1122 = vmatpush1.msra.mxu0 %v534
    %1123 = vmatprep.subr.mxu0 0.0
    %1124 = vmatpush1.msra.mxu0 0.0
    %1125 = vmatprep.subr.mxu0 0.0
    %1126 = vmatpush1.msra.mxu0 0.0
    %1127 = vmatprep.subr.mxu0 0.0
    %1128 = vmatpush1.msra.mxu0 0.0
    %1129 = vmatprep.subr.mxu0 0.0
    %1130 = vmatpush1.msra.mxu0 0.0
    %1131 = vmatprep.subr.mxu0 0.0
    %1132 = vmatpush1.msra.mxu0 0.0
    %1133 = vmatprep.subr.mxu0 0.0
    %1134 = vmatpush1.msra.mxu0 0.0
    %1135 = vmatprep.subr.mxu0 0.0
    %1136 = vmatpush1.msra.mxu0 0.0
    %1137 = vmatprep.subr.mxu0 0.0
    %1138 = vmatpush1.msra.mxu0 0.0
    %1139 = vmatprep.subr.mxu0 0.0
    %1140 = vmatpush1.msra.mxu0 0.0
    %1141 = vmatprep.subr.mxu0 0.0
    %1142 = vmatpush1.msra.mxu0 0.0
    %1143 = vmatprep.subr.mxu0 0.0
    %1144 = vmatpush1.msra.mxu0 0.0
    %1145 = vmatprep.subr.mxu0 0.0
    %1146 = vmatpush1.msra.mxu0 0.0
    %1147 = vmatprep.subr.mxu0 0.0
    %1148 = vmatpush1.msra.mxu0 0.0
    %1149 = vmatprep.subr.mxu0 0.0
    %1150 = vmatpush1.msra.mxu0 0.0
    %1151 = vmatprep.subr.mxu0 0.0
    %1152 = vmatpush1.msra.mxu0 0.0
    %1153 = vmatprep.subr.mxu0 0.0
    %1154 = vmatpush1.msra.mxu0 0.0
    %1155 = vmatprep.mubr.f32.mxu0 0.0
    %1156 = vmatmul.mubr.f32.gmra.mrb[0].mxu0 %v1086
    %v1157 = vpop.f32.mrb[0].mxu0
    %v1158 = vadd.f32 %v547, %v1157
    %v1159 = vpop.f32.mrb[0].mxu0
    %v1160 = vadd.f32 %v551, %v1159
    %1161 = vdwg.mxu0
    %1162 = vmatprep.subr.mxu0 0.0
    %1163 = vmatpush1.msra.mxu0 %v491
    %1164 = vmatprep.subr.mxu0 0.0
    %1165 = vmatpush1.msra.mxu0 %v494
    %1166 = vmatprep.subr.mxu0 0.0
    %1167 = vmatpush1.msra.mxu0 %v497
    %1168 = vmatprep.subr.mxu0 0.0
    %1169 = vmatpush1.msra.mxu0 %v500
    %1170 = vmatprep.subr.mxu0 0.0
    %1171 = vmatpush1.msra.mxu0 %v503
    %1172 = vmatprep.subr.mxu0 0.0
    %1173 = vmatpush1.msra.mxu0 %v506
    %1174 = vmatprep.subr.mxu0 0.0
    %1175 = vmatpush1.msra.mxu0 %v509
    %1176 = vmatprep.subr.mxu0 0.0
    %1177 = vmatpush1.msra.mxu0 %v512
    %1178 = vmatprep.subr.mxu0 0.0
    %1179 = vmatpush1.msra.mxu0 %v515
    %1180 = vmatprep.subr.mxu0 0.0
    %1181 = vmatpush1.msra.mxu0 %v518
    %1182 = vmatprep.subr.mxu0 0.0
    %1183 = vmatpush1.msra.mxu0 %v521
    %1184 = vmatprep.subr.mxu0 0.0
    %1185 = vmatpush1.msra.mxu0 %v524
    %1186 = vmatprep.subr.mxu0 0.0
    %1187 = vmatpush1.msra.mxu0 %v527
    %1188 = vmatprep.subr.mxu0 0.0
    %1189 = vmatpush1.msra.mxu0 %v530
    %1190 = vmatprep.subr.mxu0 0.0
    %1191 = vmatpush1.msra.mxu0 %v533
    %1192 = vmatprep.subr.mxu0 0.0
    %1193 = vmatpush1.msra.mxu0 %v536
    %1194 = vmatprep.subr.mxu0 0.0
    %1195 = vmatpush1.msra.mxu0 0.0
    %1196 = vmatprep.subr.mxu0 0.0
    %1197 = vmatpush1.msra.mxu0 0.0
    %1198 = vmatprep.subr.mxu0 0.0
    %1199 = vmatpush1.msra.mxu0 0.0
    %1200 = vmatprep.subr.mxu0 0.0
    %1201 = vmatpush1.msra.mxu0 0.0
    %1202 = vmatprep.subr.mxu0 0.0
    %1203 = vmatpush1.msra.mxu0 0.0
    %1204 = vmatprep.subr.mxu0 0.0
    %1205 = vmatpush1.msra.mxu0 0.0
    %1206 = vmatprep.subr.mxu0 0.0
    %1207 = vmatpush1.msra.mxu0 0.0
    %1208 = vmatprep.subr.mxu0 0.0
    %1209 = vmatpush1.msra.mxu0 0.0
    %1210 = vmatprep.subr.mxu0 0.0
    %1211 = vmatpush1.msra.mxu0 0.0
    %1212 = vmatprep.subr.mxu0 0.0
    %1213 = vmatpush1.msra.mxu0 0.0
    %1214 = vmatprep.subr.mxu0 0.0
    %1215 = vmatpush1.msra.mxu0 0.0
    %1216 = vmatprep.subr.mxu0 0.0
    %1217 = vmatpush1.msra.mxu0 0.0
    %1218 = vmatprep.subr.mxu0 0.0
    %1219 = vmatpush1.msra.mxu0 0.0
    %1220 = vmatprep.subr.mxu0 0.0
    %1221 = vmatpush1.msra.mxu0 0.0
    %1222 = vmatprep.subr.mxu0 0.0
    %1223 = vmatpush1.msra.mxu0 0.0
    %1224 = vmatprep.subr.mxu0 0.0
    %1225 = vmatpush1.msra.mxu0 0.0
    %1226 = vmatprep.mubr.f32.mxu0 0.0
    %1227 = vmatmul.mubr.f32.gmra.mrb[0].mxu0 %v1086
    %v1228 = vpop.f32.mrb[0].mxu0
    %v1229 = vadd.f32 %v555, %v1228
    %v1230 = vpop.f32.mrb[0].mxu0
    %1231 = vdwg.mxu0
    %v1232 = vadd.f32 %v1088, %v1158
    %v1233 = vxor.u32 %v1232, 2147483648
    %v1234 = vmul.f32 %v1233, 1.442695
    %v1235 = vpow.pop %v1234
    %v1236 = vadd.f32 %v1235, 1.0
    %v1237 = vrcp.pop %v1236
    %v1238 = vmul.f32 1.0, %v1237
    %v1239 = vadd.f32 %v1089, %v1160
    %v1240 = vxor.u32 %v1239, 2147483648
    %v1241 = vmul.f32 %v1240, 1.442695
    %v1242 = vpow.pop %v1241
    %v1243 = vadd.f32 %v1242, 1.0
    %v1244 = vrcp.pop %v1243
    %v1245 = vmul.f32 1.0, %v1244
    %v1246 = vmul.f32 %v1238, %v1229
    %v1247 = vadd.f32 %v1090, %v1246
    %v1248 = vtanh.pop %v1247
    %v1249 = vsub.f32 1.0, %v1245
    %v1250 = vmul.f32 %v1249, %v1248
    %v1251 = vmul.f32 %v1245, %v1086
    %v1252 = vadd.f32 %v1250, %v1251
    %s1253 = sadd.s32 %s25, 3
    %v1254 = vstv %s1253
    %vm1255 = vcmp.gt.s32.totalorder %v538, %v1254
    %v1256 = vsel %vm1255, 1, 0
    %1257 = vset.pattern.permute.xlu0 0
    %1258 = vperm.xlu0 %1257, %v1256
    %v1259 = vpop.permute.xlu0 %1258
    %vm1260 = vcmp.eq.s32.totalorder %v1259, 1
    %v1261 = vsel %vm1260, %v1252, 0.0
    %s1262 = scalar_lea.vmem [#allocation3], 24
    %1263 = vst [vmem:[%s1262] sm:$0xff] %v1261
    %v1264 = vsel %vm1260, %v1252, %v1086
    %s1265 = scalar_lea.vmem [#allocation2], 96
    %v1266 = vld [vmem:[%s1265] sm:$0xff]
    %v1267 = vld [vmem:[%s1265 + $0x8] sm:$0xff]
    %v1268 = vld [vmem:[%s1265 + $0x10] sm:$0xff]
    %1269 = vmatprep.subr.mxu0 %v490
    %1270 = vmatpush1.msra.mxu0 %v489
    %1271 = vmatprep.subr.mxu0 %v493
    %1272 = vmatpush1.msra.mxu0 %v492
    %1273 = vmatprep.subr.mxu0 %v496
    %1274 = vmatpush1.msra.mxu0 %v495
    %1275 = vmatprep.subr.mxu0 %v499
    %1276 = vmatpush1.msra.mxu0 %v498
    %1277 = vmatprep.subr.mxu0 %v502
    %1278 = vmatpush1.msra.mxu0 %v501
    %1279 = vmatprep.subr.mxu0 %v505
    %1280 = vmatpush1.msra.mxu0 %v504
    %1281 = vmatprep.subr.mxu0 %v508
    %1282 = vmatpush1.msra.mxu0 %v507
    %1283 = vmatprep.subr.mxu0 %v511
    %1284 = vmatpush1.msra.mxu0 %v510
    %1285 = vmatprep.subr.mxu0 %v514
    %1286 = vmatpush1.msra.mxu0 %v513
    %1287 = vmatprep.subr.mxu0 %v517
    %1288 = vmatpush1.msra.mxu0 %v516
    %1289 = vmatprep.subr.mxu0 %v520
    %1290 = vmatpush1.msra.mxu0 %v519
    %1291 = vmatprep.subr.mxu0 %v523
    %1292 = vmatpush1.msra.mxu0 %v522
    %1293 = vmatprep.subr.mxu0 %v526
    %1294 = vmatpush1.msra.mxu0 %v525
    %1295 = vmatprep.subr.mxu0 %v529
    %1296 = vmatpush1.msra.mxu0 %v528
    %1297 = vmatprep.subr.mxu0 %v532
    %1298 = vmatpush1.msra.mxu0 %v531
    %1299 = vmatprep.subr.mxu0 %v535
    %1300 = vmatpush1.msra.mxu0 %v534
    %1301 = vmatprep.subr.mxu0 0.0
    %1302 = vmatpush1.msra.mxu0 0.0
    %1303 = vmatprep.subr.mxu0 0.0
    %1304 = vmatpush1.msra.mxu0 0.0
    %1305 = vmatprep.subr.mxu0 0.0
    %1306 = vmatpush1.msra.mxu0 0.0
    %1307 = vmatprep.subr.mxu0 0.0
    %1308 = vmatpush1.msra.mxu0 0.0
    %1309 = vmatprep.subr.mxu0 0.0
    %1310 = vmatpush1.msra.mxu0 0.0
    %1311 = vmatprep.subr.mxu0 0.0
    %1312 = vmatpush1.msra.mxu0 0.0
    %1313 = vmatprep.subr.mxu0 0.0
    %1314 = vmatpush1.msra.mxu0 0.0
    %1315 = vmatprep.subr.mxu0 0.0
    %1316 = vmatpush1.msra.mxu0 0.0
    %1317 = vmatprep.subr.mxu0 0.0
    %1318 = vmatpush1.msra.mxu0 0.0
    %1319 = vmatprep.subr.mxu0 0.0
    %1320 = vmatpush1.msra.mxu0 0.0
    %1321 = vmatprep.subr.mxu0 0.0
    %1322 = vmatpush1.msra.mxu0 0.0
    %1323 = vmatprep.subr.mxu0 0.0
    %1324 = vmatpush1.msra.mxu0 0.0
    %1325 = vmatprep.subr.mxu0 0.0
    %1326 = vmatpush1.msra.mxu0 0.0
    %1327 = vmatprep.subr.mxu0 0.0
    %1328 = vmatpush1.msra.mxu0 0.0
    %1329 = vmatprep.subr.mxu0 0.0
    %1330 = vmatpush1.msra.mxu0 0.0
    %1331 = vmatprep.subr.mxu0 0.0
    %1332 = vmatpush1.msra.mxu0 0.0
    %1333 = vmatprep.mubr.f32.mxu0 0.0
    %1334 = vmatmul.mubr.f32.gmra.mrb[0].mxu0 %v1264
    %v1335 = vpop.f32.mrb[0].mxu0
    %v1336 = vadd.f32 %v547, %v1335
    %v1337 = vpop.f32.mrb[0].mxu0
    %v1338 = vadd.f32 %v551, %v1337
    %1339 = vdwg.mxu0
    %1340 = vmatprep.subr.mxu0 0.0
    %1341 = vmatpush1.msra.mxu0 %v491
    %1342 = vmatprep.subr.mxu0 0.0
    %1343 = vmatpush1.msra.mxu0 %v494
    %1344 = vmatprep.subr.mxu0 0.0
    %1345 = vmatpush1.msra.mxu0 %v497
    %1346 = vmatprep.subr.mxu0 0.0
    %1347 = vmatpush1.msra.mxu0 %v500
    %1348 = vmatprep.subr.mxu0 0.0
    %1349 = vmatpush1.msra.mxu0 %v503
    %1350 = vmatprep.subr.mxu0 0.0
    %1351 = vmatpush1.msra.mxu0 %v506
    %1352 = vmatprep.subr.mxu0 0.0
    %1353 = vmatpush1.msra.mxu0 %v509
    %1354 = vmatprep.subr.mxu0 0.0
    %1355 = vmatpush1.msra.mxu0 %v512
    %1356 = vmatprep.subr.mxu0 0.0
    %1357 = vmatpush1.msra.mxu0 %v515
    %1358 = vmatprep.subr.mxu0 0.0
    %1359 = vmatpush1.msra.mxu0 %v518
    %1360 = vmatprep.subr.mxu0 0.0
    %1361 = vmatpush1.msra.mxu0 %v521
    %1362 = vmatprep.subr.mxu0 0.0
    %1363 = vmatpush1.msra.mxu0 %v524
    %1364 = vmatprep.subr.mxu0 0.0
    %1365 = vmatpush1.msra.mxu0 %v527
    %1366 = vmatprep.subr.mxu0 0.0
    %1367 = vmatpush1.msra.mxu0 %v530
    %1368 = vmatprep.subr.mxu0 0.0
    %1369 = vmatpush1.msra.mxu0 %v533
    %1370 = vmatprep.subr.mxu0 0.0
    %1371 = vmatpush1.msra.mxu0 %v536
    %1372 = vmatprep.subr.mxu0 0.0
    %1373 = vmatpush1.msra.mxu0 0.0
    %1374 = vmatprep.subr.mxu0 0.0
    %1375 = vmatpush1.msra.mxu0 0.0
    %1376 = vmatprep.subr.mxu0 0.0
    %1377 = vmatpush1.msra.mxu0 0.0
    %1378 = vmatprep.subr.mxu0 0.0
    %1379 = vmatpush1.msra.mxu0 0.0
    %1380 = vmatprep.subr.mxu0 0.0
    %1381 = vmatpush1.msra.mxu0 0.0
    %1382 = vmatprep.subr.mxu0 0.0
    %1383 = vmatpush1.msra.mxu0 0.0
    %1384 = vmatprep.subr.mxu0 0.0
    %1385 = vmatpush1.msra.mxu0 0.0
    %1386 = vmatprep.subr.mxu0 0.0
    %1387 = vmatpush1.msra.mxu0 0.0
    %1388 = vmatprep.subr.mxu0 0.0
    %1389 = vmatpush1.msra.mxu0 0.0
    %1390 = vmatprep.subr.mxu0 0.0
    %1391 = vmatpush1.msra.mxu0 0.0
    %1392 = vmatprep.subr.mxu0 0.0
    %1393 = vmatpush1.msra.mxu0 0.0
    %1394 = vmatprep.subr.mxu0 0.0
    %1395 = vmatpush1.msra.mxu0 0.0
    %1396 = vmatprep.subr.mxu0 0.0
    %1397 = vmatpush1.msra.mxu0 0.0
    %1398 = vmatprep.subr.mxu0 0.0
    %1399 = vmatpush1.msra.mxu0 0.0
    %1400 = vmatprep.subr.mxu0 0.0
    %1401 = vmatpush1.msra.mxu0 0.0
    %1402 = vmatprep.subr.mxu0 0.0
    %1403 = vmatpush1.msra.mxu0 0.0
    %1404 = vmatprep.mubr.f32.mxu0 0.0
    %1405 = vmatmul.mubr.f32.gmra.mrb[0].mxu0 %v1264
    %v1406 = vpop.f32.mrb[0].mxu0
    %v1407 = vadd.f32 %v555, %v1406
    %v1408 = vpop.f32.mrb[0].mxu0
    %1409 = vdwg.mxu0
    %v1410 = vadd.f32 %v1266, %v1336
    %v1411 = vxor.u32 %v1410, 2147483648
    %v1412 = vmul.f32 %v1411, 1.442695
    %v1413 = vpow.pop %v1412
    %v1414 = vadd.f32 %v1413, 1.0
    %v1415 = vrcp.pop %v1414
    %v1416 = vmul.f32 1.0, %v1415
    %v1417 = vadd.f32 %v1267, %v1338
    %v1418 = vxor.u32 %v1417, 2147483648
    %v1419 = vmul.f32 %v1418, 1.442695
    %v1420 = vpow.pop %v1419
    %v1421 = vadd.f32 %v1420, 1.0
    %v1422 = vrcp.pop %v1421
    %v1423 = vmul.f32 1.0, %v1422
    %v1424 = vmul.f32 %v1416, %v1407
    %v1425 = vadd.f32 %v1268, %v1424
    %v1426 = vtanh.pop %v1425
    %v1427 = vsub.f32 1.0, %v1423
    %v1428 = vmul.f32 %v1427, %v1426
    %v1429 = vmul.f32 %v1423, %v1264
    %v1430 = vadd.f32 %v1428, %v1429
    %s1431 = sadd.s32 %s25, 4
    %v1432 = vstv %s1431
    %vm1433 = vcmp.gt.s32.totalorder %v538, %v1432
    %v1434 = vsel %vm1433, 1, 0
    %1435 = vset.pattern.permute.xlu0 0
    %1436 = vperm.xlu0 %1435, %v1434
    %v1437 = vpop.permute.xlu0 %1436
    %vm1438 = vcmp.eq.s32.totalorder %v1437, 1
    %v1439 = vsel %vm1438, %v1430, 0.0
    %s1440 = scalar_lea.vmem [#allocation3], 32
    %1441 = vst [vmem:[%s1440] sm:$0xff] %v1439
    %v1442 = vsel %vm1438, %v1430, %v1264
    %s1443 = scalar_lea.vmem [#allocation2], 120
    %v1444 = vld [vmem:[%s1443] sm:$0xff]
    %v1445 = vld [vmem:[%s1443 + $0x8] sm:$0xff]
    %v1446 = vld [vmem:[%s1443 + $0x10] sm:$0xff]
    %1447 = vmatprep.subr.mxu0 %v490
    %1448 = vmatpush1.msra.mxu0 %v489
    %1449 = vmatprep.subr.mxu0 %v493
    %1450 = vmatpush1.msra.mxu0 %v492
    %1451 = vmatprep.subr.mxu0 %v496
    %1452 = vmatpush1.msra.mxu0 %v495
    %1453 = vmatprep.subr.mxu0 %v499
    %1454 = vmatpush1.msra.mxu0 %v498
    %1455 = vmatprep.subr.mxu0 %v502
    %1456 = vmatpush1.msra.mxu0 %v501
    %1457 = vmatprep.subr.mxu0 %v505
    %1458 = vmatpush1.msra.mxu0 %v504
    %1459 = vmatprep.subr.mxu0 %v508
    %1460 = vmatpush1.msra.mxu0 %v507
    %1461 = vmatprep.subr.mxu0 %v511
    %1462 = vmatpush1.msra.mxu0 %v510
    %1463 = vmatprep.subr.mxu0 %v514
    %1464 = vmatpush1.msra.mxu0 %v513
    %1465 = vmatprep.subr.mxu0 %v517
    %1466 = vmatpush1.msra.mxu0 %v516
    %1467 = vmatprep.subr.mxu0 %v520
    %1468 = vmatpush1.msra.mxu0 %v519
    %1469 = vmatprep.subr.mxu0 %v523
    %1470 = vmatpush1.msra.mxu0 %v522
    %1471 = vmatprep.subr.mxu0 %v526
    %1472 = vmatpush1.msra.mxu0 %v525
    %1473 = vmatprep.subr.mxu0 %v529
    %1474 = vmatpush1.msra.mxu0 %v528
    %1475 = vmatprep.subr.mxu0 %v532
    %1476 = vmatpush1.msra.mxu0 %v531
    %1477 = vmatprep.subr.mxu0 %v535
    %1478 = vmatpush1.msra.mxu0 %v534
    %1479 = vmatprep.subr.mxu0 0.0
    %1480 = vmatpush1.msra.mxu0 0.0
    %1481 = vmatprep.subr.mxu0 0.0
    %1482 = vmatpush1.msra.mxu0 0.0
    %1483 = vmatprep.subr.mxu0 0.0
    %1484 = vmatpush1.msra.mxu0 0.0
    %1485 = vmatprep.subr.mxu0 0.0
    %1486 = vmatpush1.msra.mxu0 0.0
    %1487 = vmatprep.subr.mxu0 0.0
    %1488 = vmatpush1.msra.mxu0 0.0
    %1489 = vmatprep.subr.mxu0 0.0
    %1490 = vmatpush1.msra.mxu0 0.0
    %1491 = vmatprep.subr.mxu0 0.0
    %1492 = vmatpush1.msra.mxu0 0.0
    %1493 = vmatprep.subr.mxu0 0.0
    %1494 = vmatpush1.msra.mxu0 0.0
    %1495 = vmatprep.subr.mxu0 0.0
    %1496 = vmatpush1.msra.mxu0 0.0
    %1497 = vmatprep.subr.mxu0 0.0
    %1498 = vmatpush1.msra.mxu0 0.0
    %1499 = vmatprep.subr.mxu0 0.0
    %1500 = vmatpush1.msra.mxu0 0.0
    %1501 = vmatprep.subr.mxu0 0.0
    %1502 = vmatpush1.msra.mxu0 0.0
    %1503 = vmatprep.subr.mxu0 0.0
    %1504 = vmatpush1.msra.mxu0 0.0
    %1505 = vmatprep.subr.mxu0 0.0
    %1506 = vmatpush1.msra.mxu0 0.0
    %1507 = vmatprep.subr.mxu0 0.0
    %1508 = vmatpush1.msra.mxu0 0.0
    %1509 = vmatprep.subr.mxu0 0.0
    %1510 = vmatpush1.msra.mxu0 0.0
    %1511 = vmatprep.mubr.f32.mxu0 0.0
    %1512 = vmatmul.mubr.f32.gmra.mrb[0].mxu0 %v1442
    %v1513 = vpop.f32.mrb[0].mxu0
    %v1514 = vadd.f32 %v547, %v1513
    %v1515 = vpop.f32.mrb[0].mxu0
    %v1516 = vadd.f32 %v551, %v1515
    %1517 = vdwg.mxu0
    %1518 = vmatprep.subr.mxu0 0.0
    %1519 = vmatpush1.msra.mxu0 %v491
    %1520 = vmatprep.subr.mxu0 0.0
    %1521 = vmatpush1.msra.mxu0 %v494
    %1522 = vmatprep.subr.mxu0 0.0
    %1523 = vmatpush1.msra.mxu0 %v497
    %1524 = vmatprep.subr.mxu0 0.0
    %1525 = vmatpush1.msra.mxu0 %v500
    %1526 = vmatprep.subr.mxu0 0.0
    %1527 = vmatpush1.msra.mxu0 %v503
    %1528 = vmatprep.subr.mxu0 0.0
    %1529 = vmatpush1.msra.mxu0 %v506
    %1530 = vmatprep.subr.mxu0 0.0
    %1531 = vmatpush1.msra.mxu0 %v509
    %1532 = vmatprep.subr.mxu0 0.0
    %1533 = vmatpush1.msra.mxu0 %v512
    %1534 = vmatprep.subr.mxu0 0.0
    %1535 = vmatpush1.msra.mxu0 %v515
    %1536 = vmatprep.subr.mxu0 0.0
    %1537 = vmatpush1.msra.mxu0 %v518
    %1538 = vmatprep.subr.mxu0 0.0
    %1539 = vmatpush1.msra.mxu0 %v521
    %1540 = vmatprep.subr.mxu0 0.0
    %1541 = vmatpush1.msra.mxu0 %v524
    %1542 = vmatprep.subr.mxu0 0.0
    %1543 = vmatpush1.msra.mxu0 %v527
    %1544 = vmatprep.subr.mxu0 0.0
    %1545 = vmatpush1.msra.mxu0 %v530
    %1546 = vmatprep.subr.mxu0 0.0
    %1547 = vmatpush1.msra.mxu0 %v533
    %1548 = vmatprep.subr.mxu0 0.0
    %1549 = vmatpush1.msra.mxu0 %v536
    %1550 = vmatprep.subr.mxu0 0.0
    %1551 = vmatpush1.msra.mxu0 0.0
    %1552 = vmatprep.subr.mxu0 0.0
    %1553 = vmatpush1.msra.mxu0 0.0
    %1554 = vmatprep.subr.mxu0 0.0
    %1555 = vmatpush1.msra.mxu0 0.0
    %1556 = vmatprep.subr.mxu0 0.0
    %1557 = vmatpush1.msra.mxu0 0.0
    %1558 = vmatprep.subr.mxu0 0.0
    %1559 = vmatpush1.msra.mxu0 0.0
    %1560 = vmatprep.subr.mxu0 0.0
    %1561 = vmatpush1.msra.mxu0 0.0
    %1562 = vmatprep.subr.mxu0 0.0
    %1563 = vmatpush1.msra.mxu0 0.0
    %1564 = vmatprep.subr.mxu0 0.0
    %1565 = vmatpush1.msra.mxu0 0.0
    %1566 = vmatprep.subr.mxu0 0.0
    %1567 = vmatpush1.msra.mxu0 0.0
    %1568 = vmatprep.subr.mxu0 0.0
    %1569 = vmatpush1.msra.mxu0 0.0
    %1570 = vmatprep.subr.mxu0 0.0
    %1571 = vmatpush1.msra.mxu0 0.0
    %1572 = vmatprep.subr.mxu0 0.0
    %1573 = vmatpush1.msra.mxu0 0.0
    %1574 = vmatprep.subr.mxu0 0.0
    %1575 = vmatpush1.msra.mxu0 0.0
    %1576 = vmatprep.subr.mxu0 0.0
    %1577 = vmatpush1.msra.mxu0 0.0
    %1578 = vmatprep.subr.mxu0 0.0
    %1579 = vmatpush1.msra.mxu0 0.0
    %1580 = vmatprep.subr.mxu0 0.0
    %1581 = vmatpush1.msra.mxu0 0.0
    %1582 = vmatprep.mubr.f32.mxu0 0.0
    %1583 = vmatmul.mubr.f32.gmra.mrb[0].mxu0 %v1442
    %v1584 = vpop.f32.mrb[0].mxu0
    %v1585 = vadd.f32 %v555, %v1584
    %v1586 = vpop.f32.mrb[0].mxu0
    %1587 = vdwg.mxu0
    %v1588 = vadd.f32 %v1444, %v1514
    %v1589 = vxor.u32 %v1588, 2147483648
    %v1590 = vmul.f32 %v1589, 1.442695
    %v1591 = vpow.pop %v1590
    %v1592 = vadd.f32 %v1591, 1.0
    %v1593 = vrcp.pop %v1592
    %v1594 = vmul.f32 1.0, %v1593
    %v1595 = vadd.f32 %v1445, %v1516
    %v1596 = vxor.u32 %v1595, 2147483648
    %v1597 = vmul.f32 %v1596, 1.442695
    %v1598 = vpow.pop %v1597
    %v1599 = vadd.f32 %v1598, 1.0
    %v1600 = vrcp.pop %v1599
    %v1601 = vmul.f32 1.0, %v1600
    %v1602 = vmul.f32 %v1594, %v1585
    %v1603 = vadd.f32 %v1446, %v1602
    %v1604 = vtanh.pop %v1603
    %v1605 = vsub.f32 1.0, %v1601
    %v1606 = vmul.f32 %v1605, %v1604
    %v1607 = vmul.f32 %v1601, %v1442
    %v1608 = vadd.f32 %v1606, %v1607
    %s1609 = sadd.s32 %s25, 5
    %v1610 = vstv %s1609
    %vm1611 = vcmp.gt.s32.totalorder %v538, %v1610
    %v1612 = vsel %vm1611, 1, 0
    %1613 = vset.pattern.permute.xlu0 0
    %1614 = vperm.xlu0 %1613, %v1612
    %v1615 = vpop.permute.xlu0 %1614
    %vm1616 = vcmp.eq.s32.totalorder %v1615, 1
    %v1617 = vsel %vm1616, %v1608, 0.0
    %s1618 = scalar_lea.vmem [#allocation3], 40
    %1619 = vst [vmem:[%s1618] sm:$0xff] %v1617
    %v1620 = vsel %vm1616, %v1608, %v1442
    %s1621 = scalar_lea.vmem [#allocation2], 144
    %v1622 = vld [vmem:[%s1621] sm:$0xff]
    %v1623 = vld [vmem:[%s1621 + $0x8] sm:$0xff]
    %v1624 = vld [vmem:[%s1621 + $0x10] sm:$0xff]
    %1625 = vmatprep.subr.mxu0 %v490
    %1626 = vmatpush1.msra.mxu0 %v489
    %1627 = vmatprep.subr.mxu0 %v493
    %1628 = vmatpush1.msra.mxu0 %v492
    %1629 = vmatprep.subr.mxu0 %v496
    %1630 = vmatpush1.msra.mxu0 %v495
    %1631 = vmatprep.subr.mxu0 %v499
    %1632 = vmatpush1.msra.mxu0 %v498
    %1633 = vmatprep.subr.mxu0 %v502
    %1634 = vmatpush1.msra.mxu0 %v501
    %1635 = vmatprep.subr.mxu0 %v505
    %1636 = vmatpush1.msra.mxu0 %v504
    %1637 = vmatprep.subr.mxu0 %v508
    %1638 = vmatpush1.msra.mxu0 %v507
    %1639 = vmatprep.subr.mxu0 %v511
    %1640 = vmatpush1.msra.mxu0 %v510
    %1641 = vmatprep.subr.mxu0 %v514
    %1642 = vmatpush1.msra.mxu0 %v513
    %1643 = vmatprep.subr.mxu0 %v517
    %1644 = vmatpush1.msra.mxu0 %v516
    %1645 = vmatprep.subr.mxu0 %v520
    %1646 = vmatpush1.msra.mxu0 %v519
    %1647 = vmatprep.subr.mxu0 %v523
    %1648 = vmatpush1.msra.mxu0 %v522
    %1649 = vmatprep.subr.mxu0 %v526
    %1650 = vmatpush1.msra.mxu0 %v525
    %1651 = vmatprep.subr.mxu0 %v529
    %1652 = vmatpush1.msra.mxu0 %v528
    %1653 = vmatprep.subr.mxu0 %v532
    %1654 = vmatpush1.msra.mxu0 %v531
    %1655 = vmatprep.subr.mxu0 %v535
    %1656 = vmatpush1.msra.mxu0 %v534
    %1657 = vmatprep.subr.mxu0 0.0
    %1658 = vmatpush1.msra.mxu0 0.0
    %1659 = vmatprep.subr.mxu0 0.0
    %1660 = vmatpush1.msra.mxu0 0.0
    %1661 = vmatprep.subr.mxu0 0.0
    %1662 = vmatpush1.msra.mxu0 0.0
    %1663 = vmatprep.subr.mxu0 0.0
    %1664 = vmatpush1.msra.mxu0 0.0
    %1665 = vmatprep.subr.mxu0 0.0
    %1666 = vmatpush1.msra.mxu0 0.0
    %1667 = vmatprep.subr.mxu0 0.0
    %1668 = vmatpush1.msra.mxu0 0.0
    %1669 = vmatprep.subr.mxu0 0.0
    %1670 = vmatpush1.msra.mxu0 0.0
    %1671 = vmatprep.subr.mxu0 0.0
    %1672 = vmatpush1.msra.mxu0 0.0
    %1673 = vmatprep.subr.mxu0 0.0
    %1674 = vmatpush1.msra.mxu0 0.0
    %1675 = vmatprep.subr.mxu0 0.0
    %1676 = vmatpush1.msra.mxu0 0.0
    %1677 = vmatprep.subr.mxu0 0.0
    %1678 = vmatpush1.msra.mxu0 0.0
    %1679 = vmatprep.subr.mxu0 0.0
    %1680 = vmatpush1.msra.mxu0 0.0
    %1681 = vmatprep.subr.mxu0 0.0
    %1682 = vmatpush1.msra.mxu0 0.0
    %1683 = vmatprep.subr.mxu0 0.0
    %1684 = vmatpush1.msra.mxu0 0.0
    %1685 = vmatprep.subr.mxu0 0.0
    %1686 = vmatpush1.msra.mxu0 0.0
    %1687 = vmatprep.subr.mxu0 0.0
    %1688 = vmatpush1.msra.mxu0 0.0
    %1689 = vmatprep.mubr.f32.mxu0 0.0
    %1690 = vmatmul.mubr.f32.gmra.mrb[0].mxu0 %v1620
    %v1691 = vpop.f32.mrb[0].mxu0
    %v1692 = vadd.f32 %v547, %v1691
    %v1693 = vpop.f32.mrb[0].mxu0
    %v1694 = vadd.f32 %v551, %v1693
    %1695 = vdwg.mxu0
    %1696 = vmatprep.subr.mxu0 0.0
    %1697 = vmatpush1.msra.mxu0 %v491
    %1698 = vmatprep.subr.mxu0 0.0
    %1699 = vmatpush1.msra.mxu0 %v494
    %1700 = vmatprep.subr.mxu0 0.0
    %1701 = vmatpush1.msra.mxu0 %v497
    %1702 = vmatprep.subr.mxu0 0.0
    %1703 = vmatpush1.msra.mxu0 %v500
    %1704 = vmatprep.subr.mxu0 0.0
    %1705 = vmatpush1.msra.mxu0 %v503
    %1706 = vmatprep.subr.mxu0 0.0
    %1707 = vmatpush1.msra.mxu0 %v506
    %1708 = vmatprep.subr.mxu0 0.0
    %1709 = vmatpush1.msra.mxu0 %v509
    %1710 = vmatprep.subr.mxu0 0.0
    %1711 = vmatpush1.msra.mxu0 %v512
    %1712 = vmatprep.subr.mxu0 0.0
    %1713 = vmatpush1.msra.mxu0 %v515
    %1714 = vmatprep.subr.mxu0 0.0
    %1715 = vmatpush1.msra.mxu0 %v518
    %1716 = vmatprep.subr.mxu0 0.0
    %1717 = vmatpush1.msra.mxu0 %v521
    %1718 = vmatprep.subr.mxu0 0.0
    %1719 = vmatpush1.msra.mxu0 %v524
    %1720 = vmatprep.subr.mxu0 0.0
    %1721 = vmatpush1.msra.mxu0 %v527
    %1722 = vmatprep.subr.mxu0 0.0
    %1723 = vmatpush1.msra.mxu0 %v530
    %1724 = vmatprep.subr.mxu0 0.0
    %1725 = vmatpush1.msra.mxu0 %v533
    %1726 = vmatprep.subr.mxu0 0.0
    %1727 = vmatpush1.msra.mxu0 %v536
    %1728 = vmatprep.subr.mxu0 0.0
    %1729 = vmatpush1.msra.mxu0 0.0
    %1730 = vmatprep.subr.mxu0 0.0
    %1731 = vmatpush1.msra.mxu0 0.0
    %1732 = vmatprep.subr.mxu0 0.0
    %1733 = vmatpush1.msra.mxu0 0.0
    %1734 = vmatprep.subr.mxu0 0.0
    %1735 = vmatpush1.msra.mxu0 0.0
    %1736 = vmatprep.subr.mxu0 0.0
    %1737 = vmatpush1.msra.mxu0 0.0
    %1738 = vmatprep.subr.mxu0 0.0
    %1739 = vmatpush1.msra.mxu0 0.0
    %1740 = vmatprep.subr.mxu0 0.0
    %1741 = vmatpush1.msra.mxu0 0.0
    %1742 = vmatprep.subr.mxu0 0.0
    %1743 = vmatpush1.msra.mxu0 0.0
    %1744 = vmatprep.subr.mxu0 0.0
    %1745 = vmatpush1.msra.mxu0 0.0
    %1746 = vmatprep.subr.mxu0 0.0
    %1747 = vmatpush1.msra.mxu0 0.0
    %1748 = vmatprep.subr.mxu0 0.0
    %1749 = vmatpush1.msra.mxu0 0.0
    %1750 = vmatprep.subr.mxu0 0.0
    %1751 = vmatpush1.msra.mxu0 0.0
    %1752 = vmatprep.subr.mxu0 0.0
    %1753 = vmatpush1.msra.mxu0 0.0
    %1754 = vmatprep.subr.mxu0 0.0
    %1755 = vmatpush1.msra.mxu0 0.0
    %1756 = vmatprep.subr.mxu0 0.0
    %1757 = vmatpush1.msra.mxu0 0.0
    %1758 = vmatprep.subr.mxu0 0.0
    %1759 = vmatpush1.msra.mxu0 0.0
    %1760 = vmatprep.mubr.f32.mxu0 0.0
    %1761 = vmatmul.mubr.f32.gmra.mrb[0].mxu0 %v1620
    %v1762 = vpop.f32.mrb[0].mxu0
    %v1763 = vadd.f32 %v555, %v1762
    %v1764 = vpop.f32.mrb[0].mxu0
    %1765 = vdwg.mxu0
    %v1766 = vadd.f32 %v1622, %v1692
    %v1767 = vxor.u32 %v1766, 2147483648
    %v1768 = vmul.f32 %v1767, 1.442695
    %v1769 = vpow.pop %v1768
    %v1770 = vadd.f32 %v1769, 1.0
    %v1771 = vrcp.pop %v1770
    %v1772 = vmul.f32 1.0, %v1771
    %v1773 = vadd.f32 %v1623, %v1694
    %v1774 = vxor.u32 %v1773, 2147483648
    %v1775 = vmul.f32 %v1774, 1.442695
    %v1776 = vpow.pop %v1775
    %v1777 = vadd.f32 %v1776, 1.0
    %v1778 = vrcp.pop %v1777
    %v1779 = vmul.f32 1.0, %v1778
    %v1780 = vmul.f32 %v1772, %v1763
    %v1781 = vadd.f32 %v1624, %v1780
    %v1782 = vtanh.pop %v1781
    %v1783 = vsub.f32 1.0, %v1779
    %v1784 = vmul.f32 %v1783, %v1782
    %v1785 = vmul.f32 %v1779, %v1620
    %v1786 = vadd.f32 %v1784, %v1785
    %s1787 = sadd.s32 %s25, 6
    %v1788 = vstv %s1787
    %vm1789 = vcmp.gt.s32.totalorder %v538, %v1788
    %v1790 = vsel %vm1789, 1, 0
    %1791 = vset.pattern.permute.xlu0 0
    %1792 = vperm.xlu0 %1791, %v1790
    %v1793 = vpop.permute.xlu0 %1792
    %vm1794 = vcmp.eq.s32.totalorder %v1793, 1
    %v1795 = vsel %vm1794, %v1786, 0.0
    %s1796 = scalar_lea.vmem [#allocation3], 48
    %1797 = vst [vmem:[%s1796] sm:$0xff] %v1795
    %v1798 = vsel %vm1794, %v1786, %v1620
    %s1799 = scalar_lea.vmem [#allocation2], 168
    %v1800 = vld [vmem:[%s1799] sm:$0xff]
    %v1801 = vld [vmem:[%s1799 + $0x8] sm:$0xff]
    %v1802 = vld [vmem:[%s1799 + $0x10] sm:$0xff]
    %1803 = vmatprep.subr.mxu0 %v490
    %1804 = vmatpush1.msra.mxu0 %v489
    %1805 = vmatprep.subr.mxu0 %v493
    %1806 = vmatpush1.msra.mxu0 %v492
    %1807 = vmatprep.subr.mxu0 %v496
    %1808 = vmatpush1.msra.mxu0 %v495
    %1809 = vmatprep.subr.mxu0 %v499
    %1810 = vmatpush1.msra.mxu0 %v498
    %1811 = vmatprep.subr.mxu0 %v502
    %1812 = vmatpush1.msra.mxu0 %v501
    %1813 = vmatprep.subr.mxu0 %v505
    %1814 = vmatpush1.msra.mxu0 %v504
    %1815 = vmatprep.subr.mxu0 %v508
    %1816 = vmatpush1.msra.mxu0 %v507
    %1817 = vmatprep.subr.mxu0 %v511
    %1818 = vmatpush1.msra.mxu0 %v510
    %1819 = vmatprep.subr.mxu0 %v514
    %1820 = vmatpush1.msra.mxu0 %v513
    %1821 = vmatprep.subr.mxu0 %v517
    %1822 = vmatpush1.msra.mxu0 %v516
    %1823 = vmatprep.subr.mxu0 %v520
    %1824 = vmatpush1.msra.mxu0 %v519
    %1825 = vmatprep.subr.mxu0 %v523
    %1826 = vmatpush1.msra.mxu0 %v522
    %1827 = vmatprep.subr.mxu0 %v526
    %1828 = vmatpush1.msra.mxu0 %v525
    %1829 = vmatprep.subr.mxu0 %v529
    %1830 = vmatpush1.msra.mxu0 %v528
    %1831 = vmatprep.subr.mxu0 %v532
    %1832 = vmatpush1.msra.mxu0 %v531
    %1833 = vmatprep.subr.mxu0 %v535
    %1834 = vmatpush1.msra.mxu0 %v534
    %1835 = vmatprep.subr.mxu0 0.0
    %1836 = vmatpush1.msra.mxu0 0.0
    %1837 = vmatprep.subr.mxu0 0.0
    %1838 = vmatpush1.msra.mxu0 0.0
    %1839 = vmatprep.subr.mxu0 0.0
    %1840 = vmatpush1.msra.mxu0 0.0
    %1841 = vmatprep.subr.mxu0 0.0
    %1842 = vmatpush1.msra.mxu0 0.0
    %1843 = vmatprep.subr.mxu0 0.0
    %1844 = vmatpush1.msra.mxu0 0.0
    %1845 = vmatprep.subr.mxu0 0.0
    %1846 = vmatpush1.msra.mxu0 0.0
    %1847 = vmatprep.subr.mxu0 0.0
    %1848 = vmatpush1.msra.mxu0 0.0
    %1849 = vmatprep.subr.mxu0 0.0
    %1850 = vmatpush1.msra.mxu0 0.0
    %1851 = vmatprep.subr.mxu0 0.0
    %1852 = vmatpush1.msra.mxu0 0.0
    %1853 = vmatprep.subr.mxu0 0.0
    %1854 = vmatpush1.msra.mxu0 0.0
    %1855 = vmatprep.subr.mxu0 0.0
    %1856 = vmatpush1.msra.mxu0 0.0
    %1857 = vmatprep.subr.mxu0 0.0
    %1858 = vmatpush1.msra.mxu0 0.0
    %1859 = vmatprep.subr.mxu0 0.0
    %1860 = vmatpush1.msra.mxu0 0.0
    %1861 = vmatprep.subr.mxu0 0.0
    %1862 = vmatpush1.msra.mxu0 0.0
    %1863 = vmatprep.subr.mxu0 0.0
    %1864 = vmatpush1.msra.mxu0 0.0
    %1865 = vmatprep.subr.mxu0 0.0
    %1866 = vmatpush1.msra.mxu0 0.0
    %1867 = vmatprep.mubr.f32.mxu0 0.0
    %1868 = vmatmul.mubr.f32.gmra.mrb[0].mxu0 %v1798
    %v1869 = vpop.f32.mrb[0].mxu0
    %v1870 = vadd.f32 %v547, %v1869
    %v1871 = vpop.f32.mrb[0].mxu0
    %v1872 = vadd.f32 %v551, %v1871
    %1873 = vdwg.mxu0
    %1874 = vmatprep.subr.mxu0 0.0
    %1875 = vmatpush1.msra.mxu0 %v491
    %1876 = vmatprep.subr.mxu0 0.0
    %1877 = vmatpush1.msra.mxu0 %v494
    %1878 = vmatprep.subr.mxu0 0.0
    %1879 = vmatpush1.msra.mxu0 %v497
    %1880 = vmatprep.subr.mxu0 0.0
    %1881 = vmatpush1.msra.mxu0 %v500
    %1882 = vmatprep.subr.mxu0 0.0
    %1883 = vmatpush1.msra.mxu0 %v503
    %1884 = vmatprep.subr.mxu0 0.0
    %1885 = vmatpush1.msra.mxu0 %v506
    %1886 = vmatprep.subr.mxu0 0.0
    %1887 = vmatpush1.msra.mxu0 %v509
    %1888 = vmatprep.subr.mxu0 0.0
    %1889 = vmatpush1.msra.mxu0 %v512
    %1890 = vmatprep.subr.mxu0 0.0
    %1891 = vmatpush1.msra.mxu0 %v515
    %1892 = vmatprep.subr.mxu0 0.0
    %1893 = vmatpush1.msra.mxu0 %v518
    %1894 = vmatprep.subr.mxu0 0.0
    %1895 = vmatpush1.msra.mxu0 %v521
    %1896 = vmatprep.subr.mxu0 0.0
    %1897 = vmatpush1.msra.mxu0 %v524
    %1898 = vmatprep.subr.mxu0 0.0
    %1899 = vmatpush1.msra.mxu0 %v527
    %1900 = vmatprep.subr.mxu0 0.0
    %1901 = vmatpush1.msra.mxu0 %v530
    %1902 = vmatprep.subr.mxu0 0.0
    %1903 = vmatpush1.msra.mxu0 %v533
    %1904 = vmatprep.subr.mxu0 0.0
    %1905 = vmatpush1.msra.mxu0 %v536
    %1906 = vmatprep.subr.mxu0 0.0
    %1907 = vmatpush1.msra.mxu0 0.0
    %1908 = vmatprep.subr.mxu0 0.0
    %1909 = vmatpush1.msra.mxu0 0.0
    %1910 = vmatprep.subr.mxu0 0.0
    %1911 = vmatpush1.msra.mxu0 0.0
    %1912 = vmatprep.subr.mxu0 0.0
    %1913 = vmatpush1.msra.mxu0 0.0
    %1914 = vmatprep.subr.mxu0 0.0
    %1915 = vmatpush1.msra.mxu0 0.0
    %1916 = vmatprep.subr.mxu0 0.0
    %1917 = vmatpush1.msra.mxu0 0.0
    %1918 = vmatprep.subr.mxu0 0.0
    %1919 = vmatpush1.msra.mxu0 0.0
    %1920 = vmatprep.subr.mxu0 0.0
    %1921 = vmatpush1.msra.mxu0 0.0
    %1922 = vmatprep.subr.mxu0 0.0
    %1923 = vmatpush1.msra.mxu0 0.0
    %1924 = vmatprep.subr.mxu0 0.0
    %1925 = vmatpush1.msra.mxu0 0.0
    %1926 = vmatprep.subr.mxu0 0.0
    %1927 = vmatpush1.msra.mxu0 0.0
    %1928 = vmatprep.subr.mxu0 0.0
    %1929 = vmatpush1.msra.mxu0 0.0
    %1930 = vmatprep.subr.mxu0 0.0
    %1931 = vmatpush1.msra.mxu0 0.0
    %1932 = vmatprep.subr.mxu0 0.0
    %1933 = vmatpush1.msra.mxu0 0.0
    %1934 = vmatprep.subr.mxu0 0.0
    %1935 = vmatpush1.msra.mxu0 0.0
    %1936 = vmatprep.subr.mxu0 0.0
    %1937 = vmatpush1.msra.mxu0 0.0
    %1938 = vmatprep.mubr.f32.mxu0 0.0
    %1939 = vmatmul.mubr.f32.gmra.mrb[0].mxu0 %v1798
    %v1940 = vpop.f32.mrb[0].mxu0
    %v1941 = vadd.f32 %v555, %v1940
    %v1942 = vpop.f32.mrb[0].mxu0
    %1943 = vdwg.mxu0
    %v1944 = vadd.f32 %v1800, %v1870
    %v1945 = vxor.u32 %v1944, 2147483648
    %v1946 = vmul.f32 %v1945, 1.442695
    %v1947 = vpow.pop %v1946
    %v1948 = vadd.f32 %v1947, 1.0
    %v1949 = vrcp.pop %v1948
    %v1950 = vmul.f32 1.0, %v1949
    %v1951 = vadd.f32 %v1801, %v1872
    %v1952 = vxor.u32 %v1951, 2147483648
    %v1953 = vmul.f32 %v1952, 1.442695
    %v1954 = vpow.pop %v1953
    %v1955 = vadd.f32 %v1954, 1.0
    %v1956 = vrcp.pop %v1955
    %v1957 = vmul.f32 1.0, %v1956
    %v1958 = vmul.f32 %v1950, %v1941
    %v1959 = vadd.f32 %v1802, %v1958
    %v1960 = vtanh.pop %v1959
    %v1961 = vsub.f32 1.0, %v1957
    %v1962 = vmul.f32 %v1961, %v1960
    %v1963 = vmul.f32 %v1957, %v1798
    %v1964 = vadd.f32 %v1962, %v1963
    %s1965 = sadd.s32 %s25, 7
    %v1966 = vstv %s1965
    %vm1967 = vcmp.gt.s32.totalorder %v538, %v1966
    %v1968 = vsel %vm1967, 1, 0
    %1969 = vset.pattern.permute.xlu0 0
    %1970 = vperm.xlu0 %1969, %v1968
    %v1971 = vpop.permute.xlu0 %1970
    %vm1972 = vcmp.eq.s32.totalorder %v1971, 1
    %v1973 = vsel %vm1972, %v1964, 0.0
    %s1974 = scalar_lea.vmem [#allocation3], 56
    %1975 = vst [vmem:[%s1974] sm:$0xff] %v1973
    %v1976 = vsel %vm1972, %v1964, %v1798
    %1977 = vst [vmem:[#allocation4] sm:$0xff] %v1976
    %v1978 = vld [vmem:[#allocation3] sm:$0xff]
    %v1979 = vld [vmem:[#allocation3 + $0x8] sm:$0xff]
    %v1980 = vld [vmem:[#allocation3 + $0x10] sm:$0xff]
    %v1981 = vld [vmem:[#allocation3 + $0x18] sm:$0xff]
    %v1982 = vld [vmem:[#allocation3 + $0x20] sm:$0xff]
    %v1983 = vld [vmem:[#allocation3 + $0x28] sm:$0xff]
    %v1984 = vld [vmem:[#allocation3 + $0x30] sm:$0xff]
    %v1985 = vld [vmem:[#allocation3 + $0x38] sm:$0xff]
    %v1986 = vcombine.low %v1978, %v1980
    %v1987 = vcombine.high %v1978, %v1980
    %v1989 = vunpack.c.l.s4 1983009808
    %v1990 = vunpack.c.0.s8 %v1989
    %v1991 = vlaneseq
    %v1992 = vshrl.u32 %v1991, 7
    %v1993 = vsub.s32 %v1990, %v1992
    %v1994 = vrot.slane %v1986, %v1993
    %v1996 = vunpack.c.l.s4 1983009808
    %v1997 = vunpack.c.0.s8 %v1996
    %v1998 = vlaneseq
    %v1999 = vshrl.u32 %v1998, 7
    %v2000 = vsub.s32 %v1997, %v1999
    %v2001 = vrot.slane %v1987, %v2000
    %v2002 = vcombine.low %v1979, %v1981
    %v2003 = vcombine.high %v1979, %v1981
    %v2005 = vunpack.c.l.s4 1983009808
    %v2006 = vunpack.c.0.s8 %v2005
    %v2007 = vlaneseq
    %v2008 = vshrl.u32 %v2007, 7
    %v2009 = vsub.s32 %v2006, %v2008
    %v2010 = vrot.slane %v2002, %v2009
    %v2012 = vunpack.c.l.s4 1983009808
    %v2013 = vunpack.c.0.s8 %v2012
    %v2014 = vlaneseq
    %v2015 = vshrl.u32 %v2014, 7
    %v2016 = vsub.s32 %v2013, %v2015
    %v2017 = vrot.slane %v2003, %v2016
    %v2018 = vcombine.low %v1982, %v1984
    %v2019 = vcombine.high %v1982, %v1984
    %v2021 = vunpack.c.l.s4 1983009808
    %v2022 = vunpack.c.0.s8 %v2021
    %v2023 = vlaneseq
    %v2024 = vshrl.u32 %v2023, 7
    %v2025 = vsub.s32 %v2022, %v2024
    %v2026 = vrot.slane %v2018, %v2025
    %v2028 = vunpack.c.l.s4 1983009808
    %v2029 = vunpack.c.0.s8 %v2028
    %v2030 = vlaneseq
    %v2031 = vshrl.u32 %v2030, 7
    %v2032 = vsub.s32 %v2029, %v2031
    %v2033 = vrot.slane %v2019, %v2032
    %v2034 = vcombine.low %v1983, %v1985
    %v2035 = vcombine.high %v1983, %v1985
    %v2037 = vunpack.c.l.s4 1983009808
    %v2038 = vunpack.c.0.s8 %v2037
    %v2039 = vlaneseq
    %v2040 = vshrl.u32 %v2039, 7
    %v2041 = vsub.s32 %v2038, %v2040
    %v2042 = vrot.slane %v2034, %v2041
    %v2044 = vunpack.c.l.s4 1983009808
    %v2045 = vunpack.c.0.s8 %v2044
    %v2046 = vlaneseq
    %v2047 = vshrl.u32 %v2046, 7
    %v2048 = vsub.s32 %v2045, %v2047
    %v2049 = vrot.slane %v2035, %v2048
    %v2050 = vcombine.low %v1994, %v2010
    %v2051 = vcombine.high %v1994, %v2010
    %v2053 = vunpack.c.l.s4 1934713408
    %v2054 = vunpack.c.0.s8 %v2053
    %v2055 = vlaneseq
    %v2056 = vshrl.u32 %v2055, 7
    %v2057 = vsub.s32 %v2054, %v2056
    %v2058 = vrot.slane %v2050, %v2057
    %v2060 = vunpack.c.l.s4 1934713408
    %v2061 = vunpack.c.0.s8 %v2060
    %v2062 = vlaneseq
    %v2063 = vshrl.u32 %v2062, 7
    %v2064 = vsub.s32 %v2061, %v2063
    %v2065 = vrot.slane %v2051, %v2064
    %v2066 = vcombine.low %v2001, %v2017
    %v2067 = vcombine.high %v2001, %v2017
    %v2069 = vunpack.c.l.s4 1934713408
    %v2070 = vunpack.c.0.s8 %v2069
    %v2071 = vlaneseq
    %v2072 = vshrl.u32 %v2071, 7
    %v2073 = vsub.s32 %v2070, %v2072
    %v2074 = vrot.slane %v2066, %v2073
    %v2076 = vunpack.c.l.s4 1934713408
    %v2077 = vunpack.c.0.s8 %v2076
    %v2078 = vlaneseq
    %v2079 = vshrl.u32 %v2078, 7
    %v2080 = vsub.s32 %v2077, %v2079
    %v2081 = vrot.slane %v2067, %v2080
    %v2082 = vcombine.low %v2026, %v2042
    %v2083 = vcombine.high %v2026, %v2042
    %v2085 = vunpack.c.l.s4 1934713408
    %v2086 = vunpack.c.0.s8 %v2085
    %v2087 = vlaneseq
    %v2088 = vshrl.u32 %v2087, 7
    %v2089 = vsub.s32 %v2086, %v2088
    %v2090 = vrot.slane %v2082, %v2089
    %v2092 = vunpack.c.l.s4 1934713408
    %v2093 = vunpack.c.0.s8 %v2092
    %v2094 = vlaneseq
    %v2095 = vshrl.u32 %v2094, 7
    %v2096 = vsub.s32 %v2093, %v2095
    %v2097 = vrot.slane %v2083, %v2096
    %v2098 = vcombine.low %v2033, %v2049
    %v2099 = vcombine.high %v2033, %v2049
    %v2101 = vunpack.c.l.s4 1934713408
    %v2102 = vunpack.c.0.s8 %v2101
    %v2103 = vlaneseq
    %v2104 = vshrl.u32 %v2103, 7
    %v2105 = vsub.s32 %v2102, %v2104
    %v2106 = vrot.slane %v2098, %v2105
    %v2108 = vunpack.c.l.s4 1934713408
    %v2109 = vunpack.c.0.s8 %v2108
    %v2110 = vlaneseq
    %v2111 = vshrl.u32 %v2110, 7
    %v2112 = vsub.s32 %v2109, %v2111
    %v2113 = vrot.slane %v2099, %v2112
    %v2114 = vcombine.low %v2058, %v2090
    %v2115 = vcombine.high %v2058, %v2090
    %v2116 = vcombine.low %v2065, %v2097
    %v2117 = vcombine.high %v2065, %v2097
    %v2118 = vcombine.low %v2074, %v2106
    %v2119 = vcombine.high %v2074, %v2106
    %v2120 = vcombine.low %v2081, %v2113
    %v2121 = vcombine.high %v2081, %v2113
    %2122 = vst.msk [vmem:[%s7] sm:$0xff] %vm222, %v2114
    %2123 = vst.msk [vmem:[%s7 + $0x8] sm:$0xff] %vm222, %v2115
    %2124 = vst.msk [vmem:[%s7 + $0x10] sm:$0xff] %vm222, %v2116
    %2125 = vst.msk [vmem:[%s7 + $0x18] sm:$0xff] %vm222, %v2117
    %2126 = vst.msk [vmem:[%s7 + $0x20] sm:$0xff] %vm222, %v2118
    %2127 = vst.msk [vmem:[%s7 + $0x28] sm:$0xff] %vm222, %v2119
    %2128 = vst.msk [vmem:[%s7 + $0x30] sm:$0xff] %vm222, %v2120
    %2129 = vst.msk [vmem:[%s7 + $0x38] sm:$0xff] %vm222, %v2121
  $region37: #{gru_encoder_pallas.1} parent=0 // pred_fallthru
    _
  // Predicated region
  $region38: #{gru_encoder_pallas.1} parent=0 // pred_check
    _
  $region39: #{gru_encoder_pallas.1} parent=0 // pred_check_branch
    %2131 = sbr.rel (0) target = $region41
  $region40: #{gru_encoder_pallas.1} parent=0 // pred_region
    _
  $region41: #{gru_encoder_pallas.1} parent=0 // pred_fallthru
    _
  // Predicated region
  $region42: #{gru_encoder_pallas.1} parent=0 // pred_check
    _
  $region43: #{gru_encoder_pallas.1} parent=0 // pred_check_branch
    %2133 = sbr.rel (0) target = $region45
  $region44: #{gru_encoder_pallas.1} parent=0 // pred_region
    _
  $region45: #{gru_encoder_pallas.1} parent=0 // pred_fallthru
    _

</llo_original>
